<compile_context>
chip_gen: v7x
topology: tpu7x:2x2x1
jax: 0.10.0
libtpu: 0.0.40
codegen_flags: <defaults>
</compile_context>

<pallas_src>
import math

import jax
import jax.numpy as jnp
from jax import lax
from jax.experimental import pallas as pl
from jax.experimental.pallas import tpu as pltpu

# ----------------------------- configuration --------------------------------
B = 2            # batch
N = 64           # npoints (small stand-in for 2048)
A = 4            # num_anchors
L = 32           # part latent dim
H = 32           # encoder hidden
G = 32           # global feature dim
H2 = 32          # diffusion eps-net hidden
T = 16           # num_timesteps
DIN = 3 + A      # xyz + attn_map (include_attn_weight_in_encoder=True)
KL_WEIGHT = 1e-3
ANCHOR_LOSS_WEIGHT = 1.0


# ------------------------------- fused kernel --------------------------------
def _fused_kernel(coef_ref,                        # SMEM [B, 3] scalars
                  x_ref, ref_ref, noise_ref, reps_ref, seg_ref,
                  enc_w1_ref, enc_b1_ref, enc_w2_ref, enc_b2_ref,
                  reg_w_ref, reg_b_ref,
                  dec_w_ref, dec_b_ref,
                  eps_wx_ref, eps_wal_ref, eps_wg_ref,
                  eps_bt_ref, eps_b1_ref, eps_w2_ref, eps_b2_ref,
                  loss_ref):
    f32 = jnp.float32
    b = pl.program_id(0)
    c0 = coef_ref[b, 0]     # sqrt(alpha_bar_t)
    c1 = coef_ref[b, 1]     # sqrt(1 - alpha_bar_t)
    tf = coef_ref[b, 2]     # t / T (time-embedding scale)

    # ---------------- encoder: per-point MLP + attn-weighted pooling --------
    x = x_ref[0]                                   # [N, 3+A]
    attn = x[:, 3:]                                # [N, A] (attention weights)
    h = jnp.maximum(
        jnp.dot(x, enc_w1_ref[...], preferred_element_type=f32) + enc_b1_ref[...], 0.0)
    f = jnp.dot(h, enc_w2_ref[...], preferred_element_type=f32) + enc_b2_ref[...]   # [N, L]

    contract_n = (((0,), (0,)), ((), ()))          # contract over the N axis
    pooled = lax.dot_general(attn, f, contract_n, preferred_element_type=f32)       # [A, L]
    ones_col = jnp.ones((N, 1), f32)
    wsum = lax.dot_general(attn, ones_col, contract_n, preferred_element_type=f32)  # [A, 1]
    part_latent = pooled * pl.reciprocal(wsum + 1e-6, approx=True)                  # [A, L]

    # ---------------- parameter regressor (fused mean|logvar heads) ---------
    y = jnp.dot(part_latent, reg_w_ref[...], preferred_element_type=f32) + reg_b_ref[...]  # [A, 2L]
    means = y[:, :L]
    logvars = y[:, L:]
    z = means + jnp.exp(0.5 * logvars) * reps_ref[0]                                # reparameterize

    # prior partial: sum_{a,l} 0.5*(z^2 - 1 - logvar)  == sum_a(-log_pz - entropy)
    prior_part = 0.5 * jnp.sum(z * z - 1.0 - logvars)

    # ---------------- decomposer (fused heads, columns [anchor(3)|plat(L)|glob(G)])
    d = jnp.dot(z, dec_w_ref[...], preferred_element_type=f32) + dec_b_ref[...]     # [A, 3+L+G]
    pre = d[:, :3 + L]                                                              # [A, 3+L]
    col = lax.broadcasted_iota(jnp.int32, pre.shape, 1)
    table = jnp.where(col < 3, jnp.tanh(pre), pre)      # tanh only on the anchor cols
    gfeat = jnp.max(jnp.maximum(d[:, 3 + L:], 0.0), axis=0, keepdims=True)          # [1, G]

    # ---------------- per-point losses (gather, q_sample, eps-net) ----------
    seg = seg_ref[0]                                                                # [N, 1] int32
    iota_a = lax.broadcasted_iota(jnp.int32, (N, A), 1)
    onehot = (iota_a == seg).astype(f32)                                            # [N, A]
    gathered = jnp.dot(onehot, table, preferred_element_type=f32)                   # [N, 3+L]
    app = gathered[:, :3]                                                           # anchor per point

    ref_pts = ref_ref[0]                                                            # [N, 3]
    noise = noise_ref[0]                                                            # [N, 3]
    x_t = c0 * ref_pts + c1 * noise                                                 # DDPM q_sample

    shared_bias = (jnp.dot(gfeat, eps_wg_ref[...], preferred_element_type=f32)
                   + tf * eps_bt_ref[...] + eps_b1_ref[...])                        # [1, H2]
    hh = jnp.maximum(
        jnp.dot(x_t, eps_wx_ref[...], preferred_element_type=f32)
        + jnp.dot(gathered, eps_wal_ref[...], preferred_element_type=f32)
        + shared_bias, 0.0)                                                         # [N, H2]
    eps_pred = jnp.dot(hh, eps_w2_ref[...], preferred_element_type=f32) + eps_b2_ref[...]  # [N, 3]

    da = app - ref_pts
    de = eps_pred - noise
    a_sum = jnp.sum(da * da)       # anchor-loss partial (sum over N*3)
    e_sum = jnp.sum(de * de)       # diffusion-loss partial (sum over N*3)

    # lane-dense fully-reduced output: rows = (anchor, diffusion, prior)
    ridx = lax.broadcasted_iota(jnp.int32, (1, 3, 128), 1)
    loss_ref[...] = jnp.where(ridx == 0, a_sum,
                              jnp.where(ridx == 1, e_sum, prior_part))


# ------------------------------ pallas wrapper --------------------------------
def fused_forward(coeffs, x, ref, noise, reps, seg, p):
    wspec = lambda shape: pl.BlockSpec(shape, lambda b: (0, 0))
    return pl.pallas_call(
        _fused_kernel,
        out_shape=jax.ShapeDtypeStruct((B, 3, 128), jnp.float32),
        grid=(B,),
        in_specs=[
            pl.BlockSpec(memory_space=pltpu.MemorySpace.SMEM),        # coeffs [B,3]
            pl.BlockSpec((1, N, DIN), lambda b: (b, 0, 0)),           # x
            pl.BlockSpec((1, N, 3), lambda b: (b, 0, 0)),             # ref
            pl.BlockSpec((1, N, 3), lambda b: (b, 0, 0)),             # noise
            pl.BlockSpec((1, A, L), lambda b: (b, 0, 0)),             # reparam eps
            pl.BlockSpec((1, N, 1), lambda b: (b, 0, 0)),             # seg_mask (int32)
            wspec((DIN, H)), wspec((1, H)),                           # encoder
            wspec((H, L)), wspec((1, L)),
            wspec((L, 2 * L)), wspec((1, 2 * L)),                     # regressor (fused)
            wspec((L, 3 + L + G)), wspec((1, 3 + L + G)),             # decomposer (fused)
            wspec((3, H2)), wspec((3 + L, H2)), wspec((G, H2)),       # eps-net
            wspec((1, H2)), wspec((1, H2)),
            wspec((H2, 3)), wspec((1, 3)),
        ],
        out_specs=pl.BlockSpec((1, 3, 128), lambda b: (b, 0, 0)),
        compiler_params=pltpu.CompilerParams(dimension_semantics=("parallel",)),
    )(coeffs, x, ref, noise, reps, seg,
      p["enc_w1"], p["enc_b1"], p["enc_w2"], p["enc_b2"],
      p["reg_w"], p["reg_b"], p["dec_w"], p["dec_b"],
      p["eps_wx"], p["eps_wal"], p["eps_wg"],
      p["eps_bt"], p["eps_b1"], p["eps_w2"], p["eps_b2"])


# ------------------------------ parameters ------------------------------------
def init_params(key):
    ks = jax.random.split(key, 9)
    n = lambda k, s: (0.1 * jax.random.normal(k, s)).astype(jnp.float32)
    z = lambda s: jnp.zeros(s, jnp.float32)
    return {
        # encoder (per-point MLP)
        "enc_w1": n(ks[0], (DIN, H)), "enc_b1": z((1, H)),
        "enc_w2": n(ks[1], (H, L)), "enc_b2": z((1, L)),
        # parameter regressor: fused [means | logvars] heads
        "reg_w": n(ks[2], (L, 2 * L)), "reg_b": z((1, 2 * L)),
        # decomposer: fused heads, column order [anchor(3) | part_latent(L) | global(G)]
        "dec_w": n(ks[3], (L, 3 + L + G)), "dec_b": z((1, 3 + L + G)),
        # diffusion eps-net (pointwise MLP)
        # TODO(synk): stand-in for the config-built diffusion eps network.
        "eps_wx": n(ks[4], (3, H2)),           # x_t branch
        "eps_wal": n(ks[5], (3 + L, H2)),      # fused [anchor_per_point | latent_per_point]
        "eps_wg": n(ks[6], (G, H2)),           # global-feature branch (shared bias)
        "eps_bt": n(ks[7], (1, H2)),           # time embedding
        "eps_b1": z((1, H2)),
        "eps_w2": n(ks[8], (H2, 3)), "eps_b2": z((1, 3)),
    }


# ------------------------------ forward (training) ----------------------------
def forward_train(params, pcds, key):
    inp = pcds["input"]          # [B, N, 3]
    ref = pcds["ref"]            # [B, N, 3]
    attn_map = pcds["attn_map"]  # [B, N, A]
    seg_mask = pcds["seg_mask"]  # [B, N] int32

    k_eps, k_t, k_noise = jax.random.split(key, 3)

    # include_attn_weight_in_encoder=True
    x = jnp.concatenate([inp, attn_map], axis=-1)                     # [B, N, 3+A]

    # reparameterization / diffusion noise sampled in glue (kept deterministic)
    reps = jax.random.normal(k_eps, (B, A, L), jnp.float32)
    noise = jax.random.normal(k_noise, (B, N, 3), jnp.float32)

    # sampler: uniform timestep per batch; DDPM linear schedule coefficients
    t = jax.random.randint(k_t, (B,), 0, T)
    betas = jnp.linspace(1e-4, 2e-2, T, dtype=jnp.float32)
    abar = jnp.cumprod(1.0 - betas)
    coeffs = jnp.stack([jnp.sqrt(abar)[t], jnp.sqrt(1.0 - abar)[t],
                        t.astype(jnp.float32) / T], axis=1)           # [B, 3]

    seg3 = seg_mask.astype(jnp.int32)[:, :, None]                     # [B, N, 1]

    parts = fused_forward(coeffs, x, ref, noise, reps, seg3, params)  # [B, 3, 128]
    vals = parts[:, :, 0]                                             # [B, 3]

    denom = float(B * N * 3)
    # TODO(synk): loss_func / diffusion.training_losses are config-built; MSE-mean stand-ins.
    anchor_loss = ANCHOR_LOSS_WEIGHT * (jnp.sum(vals[:, 0]) / denom)
    diffusion_loss = jnp.sum(vals[:, 1]) / denom
    prior_loss = KL_WEIGHT * (jnp.sum(vals[:, 2]) / float(B * A))

    return {"prior_loss": prior_loss,
            "anchor_loss": anchor_loss,
            "diffusion_loss": diffusion_loss}


# ---------------------------------- main --------------------------------------
if __name__ == "__main__":
    root = jax.random.PRNGKey(0)
    k_par, k_in, k_ref, k_attn, k_seg, k_fwd = jax.random.split(root, 6)

    params = init_params(k_par)

    pcds = {
        "input": jax.random.normal(k_in, (B, N, 3), jnp.float32),
        "ref": jax.random.normal(k_ref, (B, N, 3), jnp.float32),
        "attn_map": jax.nn.softmax(jax.random.normal(k_attn, (B, N, A), jnp.float32), axis=-1),
        "seg_mask": jax.random.randint(k_seg, (B, N), 0, A).astype(jnp.int32),
        "shift": jnp.zeros((B, 1, 3), jnp.float32),
        "scale": jnp.ones((B, 1, 1), jnp.float32),
    }

    losses = forward_train(params, pcds, k_fwd)
    losses = jax.tree_util.tree_map(jax.block_until_ready, losses)

    for k in ("prior_loss", "anchor_loss", "diffusion_loss"):
        assert jnp.isfinite(losses[k]).item(), f"non-finite {k}"
    print("KERNEL_OK")
</pallas_src>

<mosaic_0001>
module attributes {stable_mosaic.version = 11 : i64} {
  func.func @_fused_kernel(%arg0: i32, %arg1: memref<2x3xf32, #tpu.memory_space<smem>>, %arg2: memref<1x64x7xf32, #tpu.memory_space<vmem>>, %arg3: memref<1x64x3xf32, #tpu.memory_space<vmem>>, %arg4: memref<1x64x3xf32, #tpu.memory_space<vmem>>, %arg5: memref<1x4x32xf32, #tpu.memory_space<vmem>>, %arg6: memref<1x64x1xi32, #tpu.memory_space<vmem>>, %arg7: memref<7x32xf32, #tpu.memory_space<vmem>>, %arg8: memref<1x32xf32, #tpu.memory_space<vmem>>, %arg9: memref<32x32xf32, #tpu.memory_space<vmem>>, %arg10: memref<1x32xf32, #tpu.memory_space<vmem>>, %arg11: memref<32x64xf32, #tpu.memory_space<vmem>>, %arg12: memref<1x64xf32, #tpu.memory_space<vmem>>, %arg13: memref<32x67xf32, #tpu.memory_space<vmem>>, %arg14: memref<1x67xf32, #tpu.memory_space<vmem>>, %arg15: memref<3x32xf32, #tpu.memory_space<vmem>>, %arg16: memref<35x32xf32, #tpu.memory_space<vmem>>, %arg17: memref<32x32xf32, #tpu.memory_space<vmem>>, %arg18: memref<1x32xf32, #tpu.memory_space<vmem>>, %arg19: memref<1x32xf32, #tpu.memory_space<vmem>>, %arg20: memref<32x3xf32, #tpu.memory_space<vmem>>, %arg21: memref<1x3xf32, #tpu.memory_space<vmem>>, %arg22: memref<1x3x128xf32, #tpu.memory_space<vmem>>) attributes {dimension_semantics = [#tpu.dimension_semantics<parallel>], iteration_bounds = array<i64: 2>, scalar_prefetch = 0 : i64, scratch_operands = 0 : i64, tpu.core_type = #tpu.core_type<tc>, window_params = [{transform_indices = @transform_0, window_bounds = array<i64: 2, 3>}, {transform_indices = @transform_1, window_bounds = array<i64: 1, 64, 7>}, {transform_indices = @transform_2, window_bounds = array<i64: 1, 64, 3>}, {transform_indices = @transform_3, window_bounds = array<i64: 1, 64, 3>}, {transform_indices = @transform_4, window_bounds = array<i64: 1, 4, 32>}, {transform_indices = @transform_5, window_bounds = array<i64: 1, 64, 1>}, {pipeline_mode = #tpu.pipeline_mode<synchronous>, transform_indices = @transform_6, window_bounds = array<i64: 7, 32>}, {pipeline_mode = #tpu.pipeline_mode<synchronous>, transform_indices = @transform_7, window_bounds = array<i64: 1, 32>}, {pipeline_mode = #tpu.pipeline_mode<synchronous>, transform_indices = @transform_8, window_bounds = array<i64: 32, 32>}, {pipeline_mode = #tpu.pipeline_mode<synchronous>, transform_indices = @transform_9, window_bounds = array<i64: 1, 32>}, {pipeline_mode = #tpu.pipeline_mode<synchronous>, transform_indices = @transform_10, window_bounds = array<i64: 32, 64>}, {pipeline_mode = #tpu.pipeline_mode<synchronous>, transform_indices = @transform_11, window_bounds = array<i64: 1, 64>}, {pipeline_mode = #tpu.pipeline_mode<synchronous>, transform_indices = @transform_12, window_bounds = array<i64: 32, 67>}, {pipeline_mode = #tpu.pipeline_mode<synchronous>, transform_indices = @transform_13, window_bounds = array<i64: 1, 67>}, {pipeline_mode = #tpu.pipeline_mode<synchronous>, transform_indices = @transform_14, window_bounds = array<i64: 3, 32>}, {pipeline_mode = #tpu.pipeline_mode<synchronous>, transform_indices = @transform_15, window_bounds = array<i64: 35, 32>}, {pipeline_mode = #tpu.pipeline_mode<synchronous>, transform_indices = @transform_16, window_bounds = array<i64: 32, 32>}, {pipeline_mode = #tpu.pipeline_mode<synchronous>, transform_indices = @transform_17, window_bounds = array<i64: 1, 32>}, {pipeline_mode = #tpu.pipeline_mode<synchronous>, transform_indices = @transform_18, window_bounds = array<i64: 1, 32>}, {pipeline_mode = #tpu.pipeline_mode<synchronous>, transform_indices = @transform_19, window_bounds = array<i64: 32, 3>}, {pipeline_mode = #tpu.pipeline_mode<synchronous>, transform_indices = @transform_20, window_bounds = array<i64: 1, 3>}, {transform_indices = @transform_21, window_bounds = array<i64: 1, 3, 128>}]} {
    %0 = arith.index_cast %arg0 : i32 to index
    %c0 = arith.constant 0 : index
    %1 = memref.load %arg1[%0, %c0] : memref<2x3xf32, #tpu.memory_space<smem>>
    %2 = arith.index_cast %arg0 : i32 to index
    %c1 = arith.constant 1 : index
    %3 = memref.load %arg1[%2, %c1] : memref<2x3xf32, #tpu.memory_space<smem>>
    %4 = arith.index_cast %arg0 : i32 to index
    %c2 = arith.constant 2 : index
    %5 = memref.load %arg1[%4, %c2] : memref<2x3xf32, #tpu.memory_space<smem>>
    %c0_0 = arith.constant 0 : index
    %c0_1 = arith.constant 0 : index
    %c0_2 = arith.constant 0 : index
    %6 = vector.load %arg2[%c0_0, %c0_1, %c0_2] : memref<1x64x7xf32, #tpu.memory_space<vmem>>, vector<1x64x7xf32>
    %7 = vector.shape_cast %6 : vector<1x64x7xf32> to vector<64x7xf32>
    %8 = vector.extract_strided_slice %7 {offsets = [0, 3], sizes = [64, 4], strides = [1, 1]} : vector<64x7xf32> to vector<64x4xf32>
    %c0_3 = arith.constant 0 : index
    %c0_4 = arith.constant 0 : index
    %9 = vector.load %arg7[%c0_3, %c0_4] : memref<7x32xf32, #tpu.memory_space<vmem>>, vector<7x32xf32>
    %cst = arith.constant dense<0.000000e+00> : vector<64x32xf32>
    %10 = tpu.matmul %7, %9, %cst {dimension_numbers = #tpu.dot_dimension_numbers<[1], [0], [0], [1], [0, 0, 1, 1], [], []>} : vector<64x7xf32>, vector<7x32xf32>, vector<64x32xf32> -> vector<64x32xf32>
    %c0_5 = arith.constant 0 : index
    %c0_6 = arith.constant 0 : index
    %11 = vector.load %arg8[%c0_5, %c0_6] : memref<1x32xf32, #tpu.memory_space<vmem>>, vector<1x32xf32>
    %12 = vector.broadcast %11 : vector<1x32xf32> to vector<64x32xf32>
    %13 = arith.addf %10, %12 : vector<64x32xf32>
    %cst_7 = arith.constant 0.000000e+00 : f32
    %14 = vector.broadcast %cst_7 : f32 to vector<64x32xf32>
    %15 = arith.maximumf %13, %14 : vector<64x32xf32>
    %c0_8 = arith.constant 0 : index
    %c0_9 = arith.constant 0 : index
    %16 = vector.load %arg9[%c0_8, %c0_9] : memref<32x32xf32, #tpu.memory_space<vmem>>, vector<32x32xf32>
    %cst_10 = arith.constant dense<0.000000e+00> : vector<64x32xf32>
    %17 = tpu.matmul %15, %16, %cst_10 {dimension_numbers = #tpu.dot_dimension_numbers<[1], [0], [0], [1], [0, 0, 1, 1], [], []>} : vector<64x32xf32>, vector<32x32xf32>, vector<64x32xf32> -> vector<64x32xf32>
    %c0_11 = arith.constant 0 : index
    %c0_12 = arith.constant 0 : index
    %18 = vector.load %arg10[%c0_11, %c0_12] : memref<1x32xf32, #tpu.memory_space<vmem>>, vector<1x32xf32>
    %19 = vector.broadcast %18 : vector<1x32xf32> to vector<64x32xf32>
    %20 = arith.addf %17, %19 : vector<64x32xf32>
    %cst_13 = arith.constant dense<0.000000e+00> : vector<4x32xf32>
    %21 = tpu.matmul %8, %20, %cst_13 {dimension_numbers = #tpu.dot_dimension_numbers<[0], [0], [1], [1], [0, 1, 1, 1], [], []>} : vector<64x4xf32>, vector<64x32xf32>, vector<4x32xf32> -> vector<4x32xf32>
    %cst_14 = arith.constant 1.000000e+00 : f32
    %22 = vector.broadcast %cst_14 : f32 to vector<64x1xf32>
    %cst_15 = arith.constant dense<0.000000e+00> : vector<4x1xf32>
    %23 = tpu.matmul %8, %22, %cst_15 {dimension_numbers = #tpu.dot_dimension_numbers<[0], [0], [1], [1], [0, 1, 1, 1], [], []>} : vector<64x4xf32>, vector<64x1xf32>, vector<4x1xf32> -> vector<4x1xf32>
    %cst_16 = arith.constant 9.99999997E-7 : f32
    %24 = vector.broadcast %cst_16 : f32 to vector<4x1xf32>
    %25 = arith.addf %23, %24 : vector<4x1xf32>
    %26 = tpu.reciprocal %25 {approx = true} : vector<4x1xf32> -> vector<4x1xf32>
    %27 = vector.broadcast %26 : vector<4x1xf32> to vector<4x32xf32>
    %28 = arith.mulf %21, %27 : vector<4x32xf32>
    %c0_17 = arith.constant 0 : index
    %c0_18 = arith.constant 0 : index
    %29 = vector.load %arg11[%c0_17, %c0_18] : memref<32x64xf32, #tpu.memory_space<vmem>>, vector<32x64xf32>
    %cst_19 = arith.constant dense<0.000000e+00> : vector<4x64xf32>
    %30 = tpu.matmul %28, %29, %cst_19 {dimension_numbers = #tpu.dot_dimension_numbers<[1], [0], [0], [1], [0, 0, 1, 1], [], []>} : vector<4x32xf32>, vector<32x64xf32>, vector<4x64xf32> -> vector<4x64xf32>
    %c0_20 = arith.constant 0 : index
    %c0_21 = arith.constant 0 : index
    %31 = vector.load %arg12[%c0_20, %c0_21] : memref<1x64xf32, #tpu.memory_space<vmem>>, vector<1x64xf32>
    %32 = vector.broadcast %31 : vector<1x64xf32> to vector<4x64xf32>
    %33 = arith.addf %30, %32 : vector<4x64xf32>
    %34 = vector.extract_strided_slice %33 {offsets = [0, 0], sizes = [4, 32], strides = [1, 1]} : vector<4x64xf32> to vector<4x32xf32>
    %35 = vector.extract_strided_slice %33 {offsets = [0, 32], sizes = [4, 32], strides = [1, 1]} : vector<4x64xf32> to vector<4x32xf32>
    %cst_22 = arith.constant 5.000000e-01 : f32
    %36 = vector.broadcast %cst_22 : f32 to vector<4x32xf32>
    %37 = arith.mulf %36, %35 : vector<4x32xf32>
    %38 = math.exp %37 : vector<4x32xf32>
    %c0_23 = arith.constant 0 : index
    %c0_24 = arith.constant 0 : index
    %c0_25 = arith.constant 0 : index
    %39 = vector.load %arg5[%c0_23, %c0_24, %c0_25] : memref<1x4x32xf32, #tpu.memory_space<vmem>>, vector<1x4x32xf32>
    %40 = vector.shape_cast %39 : vector<1x4x32xf32> to vector<4x32xf32>
    %41 = arith.mulf %38, %40 : vector<4x32xf32>
    %42 = arith.addf %34, %41 : vector<4x32xf32>
    %43 = arith.mulf %42, %42 : vector<4x32xf32>
    %cst_26 = arith.constant 1.000000e+00 : f32
    %44 = vector.broadcast %cst_26 : f32 to vector<4x32xf32>
    %45 = arith.subf %43, %44 : vector<4x32xf32>
    %46 = arith.subf %45, %35 : vector<4x32xf32>
    %47 = vector.shape_cast %46 : vector<4x32xf32> to vector<1x4x32xf32>
    %cst_27 = arith.constant dense<0.000000e+00> : vector<1xf32>
    %48 = vector.multi_reduction <add>, %47, %cst_27 [1, 2] : vector<1x4x32xf32> to vector<1xf32>
    %49 = vector.shape_cast %48 : vector<1xf32> to vector<1x1x1xf32>
    %50 = vector.extract %49[0, 0, 0] : f32 from vector<1x1x1xf32>
    %cst_28 = arith.constant 5.000000e-01 : f32
    %51 = arith.mulf %cst_28, %50 : f32
    %c0_29 = arith.constant 0 : index
    %c0_30 = arith.constant 0 : index
    %52 = vector.load %arg13[%c0_29, %c0_30] : memref<32x67xf32, #tpu.memory_space<vmem>>, vector<32x67xf32>
    %cst_31 = arith.constant dense<0.000000e+00> : vector<4x67xf32>
    %53 = tpu.matmul %42, %52, %cst_31 {dimension_numbers = #tpu.dot_dimension_numbers<[1], [0], [0], [1], [0, 0, 1, 1], [], []>} : vector<4x32xf32>, vector<32x67xf32>, vector<4x67xf32> -> vector<4x67xf32>
    %c0_32 = arith.constant 0 : index
    %c0_33 = arith.constant 0 : index
    %54 = vector.load %arg14[%c0_32, %c0_33] : memref<1x67xf32, #tpu.memory_space<vmem>>, vector<1x67xf32>
    %55 = vector.broadcast %54 : vector<1x67xf32> to vector<4x67xf32>
    %56 = arith.addf %53, %55 : vector<4x67xf32>
    %57 = vector.extract_strided_slice %56 {offsets = [0, 0], sizes = [4, 35], strides = [1, 1]} : vector<4x67xf32> to vector<4x35xf32>
    %58 = tpu.iota {dimensions = array<i32: 1>} : vector<4x35xi32>
    %c3_i32 = arith.constant 3 : i32
    %59 = vector.broadcast %c3_i32 : i32 to vector<4x35xi32>
    %60 = arith.cmpi slt, %58, %59 : vector<4x35xi32>
    %61 = math.tanh %57 : vector<4x35xf32>
    %62 = arith.select %60, %61, %57 : vector<4x35xi1>, vector<4x35xf32>
    %63 = vector.extract_strided_slice %56 {offsets = [0, 35], sizes = [4, 32], strides = [1, 1]} : vector<4x67xf32> to vector<4x32xf32>
    %cst_34 = arith.constant 0.000000e+00 : f32
    %64 = vector.broadcast %cst_34 : f32 to vector<4x32xf32>
    %65 = arith.maximumf %63, %64 : vector<4x32xf32>
    %cst_35 = arith.constant dense<0xFF800000> : vector<32xf32>
    %66 = vector.multi_reduction <maximumf>, %65, %cst_35 [0] : vector<4x32xf32> to vector<32xf32>
    %67 = vector.shape_cast %66 : vector<32xf32> to vector<1x32xf32>
    %c0_36 = arith.constant 0 : index
    %c0_37 = arith.constant 0 : index
    %c0_38 = arith.constant 0 : index
    %68 = vector.load %arg6[%c0_36, %c0_37, %c0_38] : memref<1x64x1xi32, #tpu.memory_space<vmem>>, vector<1x64x1xi32>
    %69 = vector.shape_cast %68 : vector<1x64x1xi32> to vector<64x1xi32>
    %70 = tpu.iota {dimensions = array<i32: 1>} : vector<64x4xi32>
    %71 = vector.broadcast %69 : vector<64x1xi32> to vector<64x4xi32>
    %72 = arith.cmpi eq, %70, %71 : vector<64x4xi32>
    %73 = arith.extui %72 : vector<64x4xi1> to vector<64x4xi32>
    %74 = arith.sitofp %73 : vector<64x4xi32> to vector<64x4xf32>
    %cst_39 = arith.constant dense<0.000000e+00> : vector<64x35xf32>
    %75 = tpu.matmul %74, %62, %cst_39 {dimension_numbers = #tpu.dot_dimension_numbers<[1], [0], [0], [1], [0, 0, 1, 1], [], []>} : vector<64x4xf32>, vector<4x35xf32>, vector<64x35xf32> -> vector<64x35xf32>
    %76 = vector.extract_strided_slice %75 {offsets = [0, 0], sizes = [64, 3], strides = [1, 1]} : vector<64x35xf32> to vector<64x3xf32>
    %c0_40 = arith.constant 0 : index
    %c0_41 = arith.constant 0 : index
    %c0_42 = arith.constant 0 : index
    %77 = vector.load %arg3[%c0_40, %c0_41, %c0_42] : memref<1x64x3xf32, #tpu.memory_space<vmem>>, vector<1x64x3xf32>
    %78 = vector.shape_cast %77 : vector<1x64x3xf32> to vector<64x3xf32>
    %c0_43 = arith.constant 0 : index
    %c0_44 = arith.constant 0 : index
    %c0_45 = arith.constant 0 : index
    %79 = vector.load %arg4[%c0_43, %c0_44, %c0_45] : memref<1x64x3xf32, #tpu.memory_space<vmem>>, vector<1x64x3xf32>
    %80 = vector.shape_cast %79 : vector<1x64x3xf32> to vector<64x3xf32>
    %81 = vector.broadcast %1 : f32 to vector<64x3xf32>
    %82 = arith.mulf %81, %78 : vector<64x3xf32>
    %83 = vector.broadcast %3 : f32 to vector<64x3xf32>
    %84 = arith.mulf %83, %80 : vector<64x3xf32>
    %85 = arith.addf %82, %84 : vector<64x3xf32>
    %c0_46 = arith.constant 0 : index
    %c0_47 = arith.constant 0 : index
    %86 = vector.load %arg17[%c0_46, %c0_47] : memref<32x32xf32, #tpu.memory_space<vmem>>, vector<32x32xf32>
    %cst_48 = arith.constant dense<0.000000e+00> : vector<1x32xf32>
    %87 = tpu.matmul %67, %86, %cst_48 {dimension_numbers = #tpu.dot_dimension_numbers<[1], [0], [0], [1], [0, 0, 1, 1], [], []>} : vector<1x32xf32>, vector<32x32xf32>, vector<1x32xf32> -> vector<1x32xf32>
    %c0_49 = arith.constant 0 : index
    %c0_50 = arith.constant 0 : index
    %88 = vector.load %arg18[%c0_49, %c0_50] : memref<1x32xf32, #tpu.memory_space<vmem>>, vector<1x32xf32>
    %89 = vector.broadcast %5 : f32 to vector<1x32xf32>
    %90 = arith.mulf %89, %88 : vector<1x32xf32>
    %91 = arith.addf %87, %90 : vector<1x32xf32>
    %c0_51 = arith.constant 0 : index
    %c0_52 = arith.constant 0 : index
    %92 = vector.load %arg19[%c0_51, %c0_52] : memref<1x32xf32, #tpu.memory_space<vmem>>, vector<1x32xf32>
    %93 = arith.addf %91, %92 : vector<1x32xf32>
    %c0_53 = arith.constant 0 : index
    %c0_54 = arith.constant 0 : index
    %94 = vector.load %arg15[%c0_53, %c0_54] : memref<3x32xf32, #tpu.memory_space<vmem>>, vector<3x32xf32>
    %cst_55 = arith.constant dense<0.000000e+00> : vector<64x32xf32>
    %95 = tpu.matmul %85, %94, %cst_55 {dimension_numbers = #tpu.dot_dimension_numbers<[1], [0], [0], [1], [0, 0, 1, 1], [], []>} : vector<64x3xf32>, vector<3x32xf32>, vector<64x32xf32> -> vector<64x32xf32>
    %c0_56 = arith.constant 0 : index
    %c0_57 = arith.constant 0 : index
    %96 = vector.load %arg16[%c0_56, %c0_57] : memref<35x32xf32, #tpu.memory_space<vmem>>, vector<35x32xf32>
    %cst_58 = arith.constant dense<0.000000e+00> : vector<64x32xf32>
    %97 = tpu.matmul %75, %96, %cst_58 {dimension_numbers = #tpu.dot_dimension_numbers<[1], [0], [0], [1], [0, 0, 1, 1], [], []>} : vector<64x35xf32>, vector<35x32xf32>, vector<64x32xf32> -> vector<64x32xf32>
    %98 = arith.addf %95, %97 : vector<64x32xf32>
    %99 = vector.broadcast %93 : vector<1x32xf32> to vector<64x32xf32>
    %100 = arith.addf %98, %99 : vector<64x32xf32>
    %cst_59 = arith.constant 0.000000e+00 : f32
    %101 = vector.broadcast %cst_59 : f32 to vector<64x32xf32>
    %102 = arith.maximumf %100, %101 : vector<64x32xf32>
    %c0_60 = arith.constant 0 : index
    %c0_61 = arith.constant 0 : index
    %103 = vector.load %arg20[%c0_60, %c0_61] : memref<32x3xf32, #tpu.memory_space<vmem>>, vector<32x3xf32>
    %cst_62 = arith.constant dense<0.000000e+00> : vector<64x3xf32>
    %104 = tpu.matmul %102, %103, %cst_62 {dimension_numbers = #tpu.dot_dimension_numbers<[1], [0], [0], [1], [0, 0, 1, 1], [], []>} : vector<64x32xf32>, vector<32x3xf32>, vector<64x3xf32> -> vector<64x3xf32>
    %c0_63 = arith.constant 0 : index
    %c0_64 = arith.constant 0 : index
    %105 = vector.load %arg21[%c0_63, %c0_64] : memref<1x3xf32, #tpu.memory_space<vmem>>, vector<1x3xf32>
    %106 = vector.broadcast %105 : vector<1x3xf32> to vector<64x3xf32>
    %107 = arith.addf %104, %106 : vector<64x3xf32>
    %108 = arith.subf %76, %78 : vector<64x3xf32>
    %109 = arith.subf %107, %80 : vector<64x3xf32>
    %110 = arith.mulf %108, %108 : vector<64x3xf32>
    %111 = vector.shape_cast %110 : vector<64x3xf32> to vector<1x64x3xf32>
    %cst_65 = arith.constant dense<0.000000e+00> : vector<1xf32>
    %112 = vector.multi_reduction <add>, %111, %cst_65 [1, 2] : vector<1x64x3xf32> to vector<1xf32>
    %113 = vector.shape_cast %112 : vector<1xf32> to vector<1x1x1xf32>
    %114 = vector.extract %113[0, 0, 0] : f32 from vector<1x1x1xf32>
    %115 = arith.mulf %109, %109 : vector<64x3xf32>
    %116 = vector.shape_cast %115 : vector<64x3xf32> to vector<1x64x3xf32>
    %cst_66 = arith.constant dense<0.000000e+00> : vector<1xf32>
    %117 = vector.multi_reduction <add>, %116, %cst_66 [1, 2] : vector<1x64x3xf32> to vector<1xf32>
    %118 = vector.shape_cast %117 : vector<1xf32> to vector<1x1x1xf32>
    %119 = vector.extract %118[0, 0, 0] : f32 from vector<1x1x1xf32>
    %120 = tpu.iota {dimensions = array<i32: 1>} : vector<1x3x128xi32>
    %c0_i32 = arith.constant 0 : i32
    %121 = vector.broadcast %c0_i32 : i32 to vector<1x3x128xi32>
    %122 = arith.cmpi eq, %120, %121 : vector<1x3x128xi32>
    %c1_i32 = arith.constant 1 : i32
    %123 = vector.broadcast %c1_i32 : i32 to vector<1x3x128xi32>
    %124 = arith.cmpi eq, %120, %123 : vector<1x3x128xi32>
    %125 = vector.broadcast %119 : f32 to vector<1x3x128xf32>
    %126 = vector.broadcast %51 : f32 to vector<1x3x128xf32>
    %127 = arith.select %124, %125, %126 : vector<1x3x128xi1>, vector<1x3x128xf32>
    %128 = vector.broadcast %114 : f32 to vector<1x3x128xf32>
    %129 = arith.select %122, %128, %127 : vector<1x3x128xi1>, vector<1x3x128xf32>
    %c0_67 = arith.constant 0 : index
    %c0_68 = arith.constant 0 : index
    %c0_69 = arith.constant 0 : index
    %130 = vector.load %arg22[%c0_67, %c0_68, %c0_69] : memref<1x3x128xf32, #tpu.memory_space<vmem>>, vector<1x3x128xf32>
    tpu.vector_store %arg22[%c0_67, %c0_68, %c0_69], %129 {strides = array<i32>} : memref<1x3x128xf32, #tpu.memory_space<vmem>>, vector<1x3x128xf32>,
    return
  }
  func.func @transform_0(%arg0: i32) -> (i32, i32) {
    %c0_i32 = arith.constant 0 : i32
    %c0_i32_0 = arith.constant 0 : i32
    %c0_i32_1 = arith.constant 0 : i32
    return %c0_i32, %c0_i32_0 : i32, i32
  }
  func.func @transform_1(%arg0: i32) -> (i32, i32, i32) {
    %c0_i32 = arith.constant 0 : i32
    %c0_i32_0 = arith.constant 0 : i32
    %c0_i32_1 = arith.constant 0 : i32
    return %arg0, %c0_i32, %c0_i32_0 : i32, i32, i32
  }
  func.func @transform_2(%arg0: i32) -> (i32, i32, i32) {
    %c0_i32 = arith.constant 0 : i32
    %c0_i32_0 = arith.constant 0 : i32
    %c0_i32_1 = arith.constant 0 : i32
    return %arg0, %c0_i32, %c0_i32_0 : i32, i32, i32
  }
  func.func @transform_3(%arg0: i32) -> (i32, i32, i32) {
    %c0_i32 = arith.constant 0 : i32
    %c0_i32_0 = arith.constant 0 : i32
    %c0_i32_1 = arith.constant 0 : i32
    return %arg0, %c0_i32, %c0_i32_0 : i32, i32, i32
  }
  func.func @transform_4(%arg0: i32) -> (i32, i32, i32) {
    %c0_i32 = arith.constant 0 : i32
    %c0_i32_0 = arith.constant 0 : i32
    %c0_i32_1 = arith.constant 0 : i32
    return %arg0, %c0_i32, %c0_i32_0 : i32, i32, i32
  }
  func.func @transform_5(%arg0: i32) -> (i32, i32, i32) {
    %c0_i32 = arith.constant 0 : i32
    %c0_i32_0 = arith.constant 0 : i32
    %c0_i32_1 = arith.constant 0 : i32
    return %arg0, %c0_i32, %c0_i32_0 : i32, i32, i32
  }
  func.func @transform_6(%arg0: i32) -> (i32, i32) {
    %c0_i32 = arith.constant 0 : i32
    %c0_i32_0 = arith.constant 0 : i32
    %c0_i32_1 = arith.constant 0 : i32
    return %c0_i32, %c0_i32_0 : i32, i32
  }
  func.func @transform_7(%arg0: i32) -> (i32, i32) {
    %c0_i32 = arith.constant 0 : i32
    %c0_i32_0 = arith.constant 0 : i32
    %c0_i32_1 = arith.constant 0 : i32
    return %c0_i32, %c0_i32_0 : i32, i32
  }
  func.func @transform_8(%arg0: i32) -> (i32, i32) {
    %c0_i32 = arith.constant 0 : i32
    %c0_i32_0 = arith.constant 0 : i32
    %c0_i32_1 = arith.constant 0 : i32
    return %c0_i32, %c0_i32_0 : i32, i32
  }
  func.func @transform_9(%arg0: i32) -> (i32, i32) {
    %c0_i32 = arith.constant 0 : i32
    %c0_i32_0 = arith.constant 0 : i32
    %c0_i32_1 = arith.constant 0 : i32
    return %c0_i32, %c0_i32_0 : i32, i32
  }
  func.func @transform_10(%arg0: i32) -> (i32, i32) {
    %c0_i32 = arith.constant 0 : i32
    %c0_i32_0 = arith.constant 0 : i32
    %c0_i32_1 = arith.constant 0 : i32
    return %c0_i32, %c0_i32_0 : i32, i32
  }
  func.func @transform_11(%arg0: i32) -> (i32, i32) {
    %c0_i32 = arith.constant 0 : i32
    %c0_i32_0 = arith.constant 0 : i32
    %c0_i32_1 = arith.constant 0 : i32
    return %c0_i32, %c0_i32_0 : i32, i32
  }
  func.func @transform_12(%arg0: i32) -> (i32, i32) {
    %c0_i32 = arith.constant 0 : i32
    %c0_i32_0 = arith.constant 0 : i32
    %c0_i32_1 = arith.constant 0 : i32
    return %c0_i32, %c0_i32_0 : i32, i32
  }
  func.func @transform_13(%arg0: i32) -> (i32, i32) {
    %c0_i32 = arith.constant 0 : i32
    %c0_i32_0 = arith.constant 0 : i32
    %c0_i32_1 = arith.constant 0 : i32
    return %c0_i32, %c0_i32_0 : i32, i32
  }
  func.func @transform_14(%arg0: i32) -> (i32, i32) {
    %c0_i32 = arith.constant 0 : i32
    %c0_i32_0 = arith.constant 0 : i32
    %c0_i32_1 = arith.constant 0 : i32
    return %c0_i32, %c0_i32_0 : i32, i32
  }
  func.func @transform_15(%arg0: i32) -> (i32, i32) {
    %c0_i32 = arith.constant 0 : i32
    %c0_i32_0 = arith.constant 0 : i32
    %c0_i32_1 = arith.constant 0 : i32
    return %c0_i32, %c0_i32_0 : i32, i32
  }
  func.func @transform_16(%arg0: i32) -> (i32, i32) {
    %c0_i32 = arith.constant 0 : i32
    %c0_i32_0 = arith.constant 0 : i32
    %c0_i32_1 = arith.constant 0 : i32
    return %c0_i32, %c0_i32_0 : i32, i32
  }
  func.func @transform_17(%arg0: i32) -> (i32, i32) {
    %c0_i32 = arith.constant 0 : i32
    %c0_i32_0 = arith.constant 0 : i32
    %c0_i32_1 = arith.constant 0 : i32
    return %c0_i32, %c0_i32_0 : i32, i32
  }
  func.func @transform_18(%arg0: i32) -> (i32, i32) {
    %c0_i32 = arith.constant 0 : i32
    %c0_i32_0 = arith.constant 0 : i32
    %c0_i32_1 = arith.constant 0 : i32
    return %c0_i32, %c0_i32_0 : i32, i32
  }
  func.func @transform_19(%arg0: i32) -> (i32, i32) {
    %c0_i32 = arith.constant 0 : i32
    %c0_i32_0 = arith.constant 0 : i32
    %c0_i32_1 = arith.constant 0 : i32
    return %c0_i32, %c0_i32_0 : i32, i32
  }
  func.func @transform_20(%arg0: i32) -> (i32, i32) {
    %c0_i32 = arith.constant 0 : i32
    %c0_i32_0 = arith.constant 0 : i32
    %c0_i32_1 = arith.constant 0 : i32
    return %c0_i32, %c0_i32_0 : i32, i32
  }
  func.func @transform_21(%arg0: i32) -> (i32, i32, i32) {
    %c0_i32 = arith.constant 0 : i32
    %c0_i32_0 = arith.constant 0 : i32
    %c0_i32_1 = arith.constant 0 : i32
    return %arg0, %c0_i32, %c0_i32_0 : i32, i32, i32
  }
}

</mosaic_0001>

<llo_original>
// kernel: tpu_custom_call.1
$region0: #{tpu_custom_call.1}
  #allocation0 [shape = 'u32[]', space=smem, size = 0x4, offset = 0x4, fixed_abs, tag = 'smem constant byte address 0x4 - core index']
  #allocation1 [shape = 'u32[144,128]{1,0:T(1,128)}', space=vmem, size = 0x12000, scoped, tag = 'internal scratch']
  %s0 = inlined_call_operand.vmem [shape: f32[2,3], index: 0, kind: input, shape index: {}]
  %s1 = inlined_call_operand.vmem [shape: f32[2,64,7], index: 1, kind: input, shape index: {}]
  %s2 = inlined_call_operand.vmem [shape: f32[2,64,3], index: 2, kind: input, shape index: {}]
  %s3 = inlined_call_operand.vmem [shape: f32[2,64,3], index: 3, kind: input, shape index: {}]
  %s4 = inlined_call_operand.vmem [shape: f32[2,4,32], index: 4, kind: input, shape index: {}]
  %s5 = inlined_call_operand.vmem [shape: s32[2,64,1], index: 5, kind: input, shape index: {}]
  %s6 = inlined_call_operand.vmem [shape: f32[7,32], index: 6, kind: input, shape index: {}]
  %s7 = inlined_call_operand.vmem [shape: f32[1,32], index: 7, kind: input, shape index: {}]
  %s8 = inlined_call_operand.vmem [shape: f32[32,32], index: 8, kind: input, shape index: {}]
  %s9 = inlined_call_operand.vmem [shape: f32[1,32], index: 9, kind: input, shape index: {}]
  %s10 = inlined_call_operand.vmem [shape: f32[32,64], index: 10, kind: input, shape index: {}]
  %s11 = inlined_call_operand.vmem [shape: f32[1,64], index: 11, kind: input, shape index: {}]
  %s12 = inlined_call_operand.vmem [shape: f32[32,67], index: 12, kind: input, shape index: {}]
  %s13 = inlined_call_operand.vmem [shape: f32[1,67], index: 13, kind: input, shape index: {}]
  %s14 = inlined_call_operand.vmem [shape: f32[3,32], index: 14, kind: input, shape index: {}]
  %s15 = inlined_call_operand.vmem [shape: f32[35,32], index: 15, kind: input, shape index: {}]
  %s16 = inlined_call_operand.vmem [shape: f32[32,32], index: 16, kind: input, shape index: {}]
  %s17 = inlined_call_operand.vmem [shape: f32[1,32], index: 17, kind: input, shape index: {}]
  %s18 = inlined_call_operand.vmem [shape: f32[1,32], index: 18, kind: input, shape index: {}]
  %s19 = inlined_call_operand.vmem [shape: f32[32,3], index: 19, kind: input, shape index: {}]
  %s20 = inlined_call_operand.vmem [shape: f32[1,3], index: 20, kind: input, shape index: {}]
  %s21 = inlined_call_operand.vmem [shape: f32[2,3,128], index: 21, kind: output, shape index: {}]
  %s22 = sld [smem:[#allocation0]]
  $region121: #{tpu_custom_call.1} parent=0
    _
  %s24 = ssub.s32 1, %s22
  %s25 = scalar_select 0, %s24, %s22
  $region1: #{tpu_custom_call.1} parent=0
    #allocation2 [shape = 'u8[1024]{0}', space=smem, size = 0x400, scoped, tag = 'input window, operand 0, single buffered']
    #allocation3 [shape = 's32[2]{0}', space=sflag, size = 0x8, scoped, tag = 'scoped memory for tpu_custom_call.1']
    %26 = vsyncpa [#allocation3], 0
    loop: start=0, step=1, limit=4
    $region2: #{tpu_custom_call.1} parent=1 // loop_pre_header
      _
    $region3: #{tpu_custom_call.1} parent=1 // loop_header
      %s28 = sphi 0, %s32
      %p29 = scmp.ge.s32.totalorder %s28, 4
      %s36 = sphi 0, %s36
      %s38 = sphi 0, %s36
      %s39 = sphi 0, %s38
      %s53 = sphi 0, %s39
      %s59 = sphi 0, %s61
      %s62 = sphi 0, %s59
      %s63 = sphi 0, %s62
      %s79 = sphi 0, %s63
      %s85 = sphi 0, %s87
      %s88 = sphi 0, %s85
      %s89 = sphi 0, %s88
      %s105 = sphi 0, %s89
      %s111 = sphi 0, %s113
      %s114 = sphi 0, %s111
      %s115 = sphi 0, %s114
      %s131 = sphi 0, %s115
      %s137 = sphi 0, %s139
      %s140 = sphi 0, %s137
      %s141 = sphi 0, %s140
      %s157 = sphi 0, %s141
      %s163 = sphi 0, %s165
      %s166 = sphi 0, %s163
      %s167 = sphi 0, %s166
      %s183 = sphi 0, %s167
      %s187 = sphi 0, %s187
      %s189 = sphi 0, %s187
      %s190 = sphi 0, %s189
      %s204 = sphi 0, %s190
      %s208 = sphi 0, %s208
      %s210 = sphi 0, %s208
      %s211 = sphi 0, %s210
      %s225 = sphi 0, %s211
      %s229 = sphi 0, %s229
      %s231 = sphi 0, %s229
      %s232 = sphi 0, %s231
      %s246 = sphi 0, %s232
      %s250 = sphi 0, %s250
      %s252 = sphi 0, %s250
      %s253 = sphi 0, %s252
      %s267 = sphi 0, %s253
      %s271 = sphi 0, %s271
      %s273 = sphi 0, %s271
      %s274 = sphi 0, %s273
      %s288 = sphi 0, %s274
      %s292 = sphi 0, %s292
      %s294 = sphi 0, %s292
      %s295 = sphi 0, %s294
      %s309 = sphi 0, %s295
      %s313 = sphi 0, %s313
      %s315 = sphi 0, %s313
      %s316 = sphi 0, %s315
      %s330 = sphi 0, %s316
      %s334 = sphi 0, %s334
      %s336 = sphi 0, %s334
      %s337 = sphi 0, %s336
      %s351 = sphi 0, %s337
      %s355 = sphi 0, %s355
      %s357 = sphi 0, %s355
      %s358 = sphi 0, %s357
      %s372 = sphi 0, %s358
      %s376 = sphi 0, %s376
      %s378 = sphi 0, %s376
      %s379 = sphi 0, %s378
      %s393 = sphi 0, %s379
      %s397 = sphi 0, %s397
      %s399 = sphi 0, %s397
      %s400 = sphi 0, %s399
      %s414 = sphi 0, %s400
      %s418 = sphi 0, %s418
      %s420 = sphi 0, %s418
      %s421 = sphi 0, %s420
      %s435 = sphi 0, %s421
      %s439 = sphi 0, %s439
      %s441 = sphi 0, %s439
      %s442 = sphi 0, %s441
      %s456 = sphi 0, %s442
      %s460 = sphi 0, %s460
      %s462 = sphi 0, %s460
      %s463 = sphi 0, %s462
      %s477 = sphi 0, %s463
      %s481 = sphi 0, %s481
      %s483 = sphi 0, %s481
      %s484 = sphi 0, %s483
      %s498 = sphi 0, %s484
      %s504 = sphi 0, %s506
      %s507 = sphi 0, %s504
      %s508 = sphi 0, %s507
      %s524 = sphi 0, %s508
    $region4: #{tpu_custom_call.1} parent=1 // loop_header_branch
      %31 = sbr.rel (%p29) target = $region8
    $region5: #{tpu_custom_call.1} parent=1 // loop_body
      %s33 = ssub.s32 %s28, 1
      %s34 = ssub.s32 %s28, 2
      %s35 = sadd.s32 %s28, 1
      %s37 = sadd.s32 %s36, 1
      %p40 = scmp.eq.s32.totalorder %s28, 1
      %p41 = scmp.ne.s32.totalorder %s36, %s38
      %p42 = scmp.eq.s32.totalorder %s28, 0
      %p43 = por %p41, %p42
      %p44 = scmp.ne.s32.totalorder %s36, %s38
      %p45 = scmp.eq.s32.totalorder %s33, 1
      %p46 = por %p44, %p45
      %p47 = scmp.ne.s32.totalorder %s38, %s39
      %p48 = scmp.eq.s32.totalorder %s33, 0
      %p49 = por %p47, %p48
      %p50 = scmp.ne.s32.totalorder %s38, %s39
      %p51 = scmp.eq.s32.totalorder %s34, 1
      %p52 = por %p50, %p51
      %p54 = scmp.ne.s32.totalorder %s39, %s53
      %p55 = scmp.eq.s32.totalorder %s34, 0
      %p56 = por %p54, %p55
      %s57 = ssub.s32 %s28, %s35
      %p58 = scmp.eq.s32.totalorder %s57, 0
      %s60 = sadd.s32 %s59, 1
      %s61 = scalar_select %p58, %s59, %s60
      %p64 = pneg %p58
      %p65 = scmp.eq.s32.totalorder %s28, 1
      %p66 = por %p64, %p65
      %p67 = scmp.ne.s32.totalorder %s59, %s62
      %p68 = scmp.eq.s32.totalorder %s28, 0
      %p69 = por %p67, %p68
      %p70 = scmp.ne.s32.totalorder %s59, %s62
      %p71 = scmp.eq.s32.totalorder %s33, 1
      %p72 = por %p70, %p71
      %p73 = scmp.ne.s32.totalorder %s62, %s63
      %p74 = scmp.eq.s32.totalorder %s33, 0
      %p75 = por %p73, %p74
      %p76 = scmp.ne.s32.totalorder %s62, %s63
      %p77 = scmp.eq.s32.totalorder %s34, 1
      %p78 = por %p76, %p77
      %p80 = scmp.ne.s32.totalorder %s63, %s79
      %p81 = scmp.eq.s32.totalorder %s34, 0
      %p82 = por %p80, %p81
      %s83 = ssub.s32 %s28, %s35
      %p84 = scmp.eq.s32.totalorder %s83, 0
      %s86 = sadd.s32 %s85, 1
      %s87 = scalar_select %p84, %s85, %s86
      %p90 = pneg %p84
      %p91 = scmp.eq.s32.totalorder %s28, 1
      %p92 = por %p90, %p91
      %p93 = scmp.ne.s32.totalorder %s85, %s88
      %p94 = scmp.eq.s32.totalorder %s28, 0
      %p95 = por %p93, %p94
      %p96 = scmp.ne.s32.totalorder %s85, %s88
      %p97 = scmp.eq.s32.totalorder %s33, 1
      %p98 = por %p96, %p97
      %p99 = scmp.ne.s32.totalorder %s88, %s89
      %p100 = scmp.eq.s32.totalorder %s33, 0
      %p101 = por %p99, %p100
      %p102 = scmp.ne.s32.totalorder %s88, %s89
      %p103 = scmp.eq.s32.totalorder %s34, 1
      %p104 = por %p102, %p103
      %p106 = scmp.ne.s32.totalorder %s89, %s105
      %p107 = scmp.eq.s32.totalorder %s34, 0
      %p108 = por %p106, %p107
      %s109 = ssub.s32 %s28, %s35
      %p110 = scmp.eq.s32.totalorder %s109, 0
      %s112 = sadd.s32 %s111, 1
      %s113 = scalar_select %p110, %s111, %s112
      %p116 = pneg %p110
      %p117 = scmp.eq.s32.totalorder %s28, 1
      %p118 = por %p116, %p117
      %p119 = scmp.ne.s32.totalorder %s111, %s114
      %p120 = scmp.eq.s32.totalorder %s28, 0
      %p121 = por %p119, %p120
      %p122 = scmp.ne.s32.totalorder %s111, %s114
      %p123 = scmp.eq.s32.totalorder %s33, 1
      %p124 = por %p122, %p123
      %p125 = scmp.ne.s32.totalorder %s114, %s115
      %p126 = scmp.eq.s32.totalorder %s33, 0
      %p127 = por %p125, %p126
      %p128 = scmp.ne.s32.totalorder %s114, %s115
      %p129 = scmp.eq.s32.totalorder %s34, 1
      %p130 = por %p128, %p129
      %p132 = scmp.ne.s32.totalorder %s115, %s131
      %p133 = scmp.eq.s32.totalorder %s34, 0
      %p134 = por %p132, %p133
      %s135 = ssub.s32 %s28, %s35
      %p136 = scmp.eq.s32.totalorder %s135, 0
      %s138 = sadd.s32 %s137, 1
      %s139 = scalar_select %p136, %s137, %s138
      %p142 = pneg %p136
      %p143 = scmp.eq.s32.totalorder %s28, 1
      %p144 = por %p142, %p143
      %p145 = scmp.ne.s32.totalorder %s137, %s140
      %p146 = scmp.eq.s32.totalorder %s28, 0
      %p147 = por %p145, %p146
      %p148 = scmp.ne.s32.totalorder %s137, %s140
      %p149 = scmp.eq.s32.totalorder %s33, 1
      %p150 = por %p148, %p149
      %p151 = scmp.ne.s32.totalorder %s140, %s141
      %p152 = scmp.eq.s32.totalorder %s33, 0
      %p153 = por %p151, %p152
      %p154 = scmp.ne.s32.totalorder %s140, %s141
      %p155 = scmp.eq.s32.totalorder %s34, 1
      %p156 = por %p154, %p155
      %p158 = scmp.ne.s32.totalorder %s141, %s157
      %p159 = scmp.eq.s32.totalorder %s34, 0
      %p160 = por %p158, %p159
      %s161 = ssub.s32 %s28, %s35
      %p162 = scmp.eq.s32.totalorder %s161, 0
      %s164 = sadd.s32 %s163, 1
      %s165 = scalar_select %p162, %s163, %s164
      %p168 = pneg %p162
      %p169 = scmp.eq.s32.totalorder %s28, 1
      %p170 = por %p168, %p169
      %p171 = scmp.ne.s32.totalorder %s163, %s166
      %p172 = scmp.eq.s32.totalorder %s28, 0
      %p173 = por %p171, %p172
      %p174 = scmp.ne.s32.totalorder %s163, %s166
      %p175 = scmp.eq.s32.totalorder %s33, 1
      %p176 = por %p174, %p175
      %p177 = scmp.ne.s32.totalorder %s166, %s167
      %p178 = scmp.eq.s32.totalorder %s33, 0
      %p179 = por %p177, %p178
      %p180 = scmp.ne.s32.totalorder %s166, %s167
      %p181 = scmp.eq.s32.totalorder %s34, 1
      %p182 = por %p180, %p181
      %p184 = scmp.ne.s32.totalorder %s167, %s183
      %p185 = scmp.eq.s32.totalorder %s34, 0
      %p186 = por %p184, %p185
      %s188 = sadd.s32 %s187, 1
      %p191 = scmp.eq.s32.totalorder %s28, 1
      %p192 = scmp.ne.s32.totalorder %s187, %s189
      %p193 = scmp.eq.s32.totalorder %s28, 0
      %p194 = por %p192, %p193
      %p195 = scmp.ne.s32.totalorder %s187, %s189
      %p196 = scmp.eq.s32.totalorder %s33, 1
      %p197 = por %p195, %p196
      %p198 = scmp.ne.s32.totalorder %s189, %s190
      %p199 = scmp.eq.s32.totalorder %s33, 0
      %p200 = por %p198, %p199
      %p201 = scmp.ne.s32.totalorder %s189, %s190
      %p202 = scmp.eq.s32.totalorder %s34, 1
      %p203 = por %p201, %p202
      %p205 = scmp.ne.s32.totalorder %s190, %s204
      %p206 = scmp.eq.s32.totalorder %s34, 0
      %p207 = por %p205, %p206
      %s209 = sadd.s32 %s208, 1
      %p212 = scmp.eq.s32.totalorder %s28, 1
      %p213 = scmp.ne.s32.totalorder %s208, %s210
      %p214 = scmp.eq.s32.totalorder %s28, 0
      %p215 = por %p213, %p214
      %p216 = scmp.ne.s32.totalorder %s208, %s210
      %p217 = scmp.eq.s32.totalorder %s33, 1
      %p218 = por %p216, %p217
      %p219 = scmp.ne.s32.totalorder %s210, %s211
      %p220 = scmp.eq.s32.totalorder %s33, 0
      %p221 = por %p219, %p220
      %p222 = scmp.ne.s32.totalorder %s210, %s211
      %p223 = scmp.eq.s32.totalorder %s34, 1
      %p224 = por %p222, %p223
      %p226 = scmp.ne.s32.totalorder %s211, %s225
      %p227 = scmp.eq.s32.totalorder %s34, 0
      %p228 = por %p226, %p227
      %s230 = sadd.s32 %s229, 1
      %p233 = scmp.eq.s32.totalorder %s28, 1
      %p234 = scmp.ne.s32.totalorder %s229, %s231
      %p235 = scmp.eq.s32.totalorder %s28, 0
      %p236 = por %p234, %p235
      %p237 = scmp.ne.s32.totalorder %s229, %s231
      %p238 = scmp.eq.s32.totalorder %s33, 1
      %p239 = por %p237, %p238
      %p240 = scmp.ne.s32.totalorder %s231, %s232
      %p241 = scmp.eq.s32.totalorder %s33, 0
      %p242 = por %p240, %p241
      %p243 = scmp.ne.s32.totalorder %s231, %s232
      %p244 = scmp.eq.s32.totalorder %s34, 1
      %p245 = por %p243, %p244
      %p247 = scmp.ne.s32.totalorder %s232, %s246
      %p248 = scmp.eq.s32.totalorder %s34, 0
      %p249 = por %p247, %p248
      %s251 = sadd.s32 %s250, 1
      %p254 = scmp.eq.s32.totalorder %s28, 1
      %p255 = scmp.ne.s32.totalorder %s250, %s252
      %p256 = scmp.eq.s32.totalorder %s28, 0
      %p257 = por %p255, %p256
      %p258 = scmp.ne.s32.totalorder %s250, %s252
      %p259 = scmp.eq.s32.totalorder %s33, 1
      %p260 = por %p258, %p259
      %p261 = scmp.ne.s32.totalorder %s252, %s253
      %p262 = scmp.eq.s32.totalorder %s33, 0
      %p263 = por %p261, %p262
      %p264 = scmp.ne.s32.totalorder %s252, %s253
      %p265 = scmp.eq.s32.totalorder %s34, 1
      %p266 = por %p264, %p265
      %p268 = scmp.ne.s32.totalorder %s253, %s267
      %p269 = scmp.eq.s32.totalorder %s34, 0
      %p270 = por %p268, %p269
      %s272 = sadd.s32 %s271, 1
      %p275 = scmp.eq.s32.totalorder %s28, 1
      %p276 = scmp.ne.s32.totalorder %s271, %s273
      %p277 = scmp.eq.s32.totalorder %s28, 0
      %p278 = por %p276, %p277
      %p279 = scmp.ne.s32.totalorder %s271, %s273
      %p280 = scmp.eq.s32.totalorder %s33, 1
      %p281 = por %p279, %p280
      %p282 = scmp.ne.s32.totalorder %s273, %s274
      %p283 = scmp.eq.s32.totalorder %s33, 0
      %p284 = por %p282, %p283
      %p285 = scmp.ne.s32.totalorder %s273, %s274
      %p286 = scmp.eq.s32.totalorder %s34, 1
      %p287 = por %p285, %p286
      %p289 = scmp.ne.s32.totalorder %s274, %s288
      %p290 = scmp.eq.s32.totalorder %s34, 0
      %p291 = por %p289, %p290
      %s293 = sadd.s32 %s292, 1
      %p296 = scmp.eq.s32.totalorder %s28, 1
      %p297 = scmp.ne.s32.totalorder %s292, %s294
      %p298 = scmp.eq.s32.totalorder %s28, 0
      %p299 = por %p297, %p298
      %p300 = scmp.ne.s32.totalorder %s292, %s294
      %p301 = scmp.eq.s32.totalorder %s33, 1
      %p302 = por %p300, %p301
      %p303 = scmp.ne.s32.totalorder %s294, %s295
      %p304 = scmp.eq.s32.totalorder %s33, 0
      %p305 = por %p303, %p304
      %p306 = scmp.ne.s32.totalorder %s294, %s295
      %p307 = scmp.eq.s32.totalorder %s34, 1
      %p308 = por %p306, %p307
      %p310 = scmp.ne.s32.totalorder %s295, %s309
      %p311 = scmp.eq.s32.totalorder %s34, 0
      %p312 = por %p310, %p311
      %s314 = sadd.s32 %s313, 1
      %p317 = scmp.eq.s32.totalorder %s28, 1
      %p318 = scmp.ne.s32.totalorder %s313, %s315
      %p319 = scmp.eq.s32.totalorder %s28, 0
      %p320 = por %p318, %p319
      %p321 = scmp.ne.s32.totalorder %s313, %s315
      %p322 = scmp.eq.s32.totalorder %s33, 1
      %p323 = por %p321, %p322
      %p324 = scmp.ne.s32.totalorder %s315, %s316
      %p325 = scmp.eq.s32.totalorder %s33, 0
      %p326 = por %p324, %p325
      %p327 = scmp.ne.s32.totalorder %s315, %s316
      %p328 = scmp.eq.s32.totalorder %s34, 1
      %p329 = por %p327, %p328
      %p331 = scmp.ne.s32.totalorder %s316, %s330
      %p332 = scmp.eq.s32.totalorder %s34, 0
      %p333 = por %p331, %p332
      %s335 = sadd.s32 %s334, 1
      %p338 = scmp.eq.s32.totalorder %s28, 1
      %p339 = scmp.ne.s32.totalorder %s334, %s336
      %p340 = scmp.eq.s32.totalorder %s28, 0
      %p341 = por %p339, %p340
      %p342 = scmp.ne.s32.totalorder %s334, %s336
      %p343 = scmp.eq.s32.totalorder %s33, 1
      %p344 = por %p342, %p343
      %p345 = scmp.ne.s32.totalorder %s336, %s337
      %p346 = scmp.eq.s32.totalorder %s33, 0
      %p347 = por %p345, %p346
      %p348 = scmp.ne.s32.totalorder %s336, %s337
      %p349 = scmp.eq.s32.totalorder %s34, 1
      %p350 = por %p348, %p349
      %p352 = scmp.ne.s32.totalorder %s337, %s351
      %p353 = scmp.eq.s32.totalorder %s34, 0
      %p354 = por %p352, %p353
      %s356 = sadd.s32 %s355, 1
      %p359 = scmp.eq.s32.totalorder %s28, 1
      %p360 = scmp.ne.s32.totalorder %s355, %s357
      %p361 = scmp.eq.s32.totalorder %s28, 0
      %p362 = por %p360, %p361
      %p363 = scmp.ne.s32.totalorder %s355, %s357
      %p364 = scmp.eq.s32.totalorder %s33, 1
      %p365 = por %p363, %p364
      %p366 = scmp.ne.s32.totalorder %s357, %s358
      %p367 = scmp.eq.s32.totalorder %s33, 0
      %p368 = por %p366, %p367
      %p369 = scmp.ne.s32.totalorder %s357, %s358
      %p370 = scmp.eq.s32.totalorder %s34, 1
      %p371 = por %p369, %p370
      %p373 = scmp.ne.s32.totalorder %s358, %s372
      %p374 = scmp.eq.s32.totalorder %s34, 0
      %p375 = por %p373, %p374
      %s377 = sadd.s32 %s376, 1
      %p380 = scmp.eq.s32.totalorder %s28, 1
      %p381 = scmp.ne.s32.totalorder %s376, %s378
      %p382 = scmp.eq.s32.totalorder %s28, 0
      %p383 = por %p381, %p382
      %p384 = scmp.ne.s32.totalorder %s376, %s378
      %p385 = scmp.eq.s32.totalorder %s33, 1
      %p386 = por %p384, %p385
      %p387 = scmp.ne.s32.totalorder %s378, %s379
      %p388 = scmp.eq.s32.totalorder %s33, 0
      %p389 = por %p387, %p388
      %p390 = scmp.ne.s32.totalorder %s378, %s379
      %p391 = scmp.eq.s32.totalorder %s34, 1
      %p392 = por %p390, %p391
      %p394 = scmp.ne.s32.totalorder %s379, %s393
      %p395 = scmp.eq.s32.totalorder %s34, 0
      %p396 = por %p394, %p395
      %s398 = sadd.s32 %s397, 1
      %p401 = scmp.eq.s32.totalorder %s28, 1
      %p402 = scmp.ne.s32.totalorder %s397, %s399
      %p403 = scmp.eq.s32.totalorder %s28, 0
      %p404 = por %p402, %p403
      %p405 = scmp.ne.s32.totalorder %s397, %s399
      %p406 = scmp.eq.s32.totalorder %s33, 1
      %p407 = por %p405, %p406
      %p408 = scmp.ne.s32.totalorder %s399, %s400
      %p409 = scmp.eq.s32.totalorder %s33, 0
      %p410 = por %p408, %p409
      %p411 = scmp.ne.s32.totalorder %s399, %s400
      %p412 = scmp.eq.s32.totalorder %s34, 1
      %p413 = por %p411, %p412
      %p415 = scmp.ne.s32.totalorder %s400, %s414
      %p416 = scmp.eq.s32.totalorder %s34, 0
      %p417 = por %p415, %p416
      %s419 = sadd.s32 %s418, 1
      %p422 = scmp.eq.s32.totalorder %s28, 1
      %p423 = scmp.ne.s32.totalorder %s418, %s420
      %p424 = scmp.eq.s32.totalorder %s28, 0
      %p425 = por %p423, %p424
      %p426 = scmp.ne.s32.totalorder %s418, %s420
      %p427 = scmp.eq.s32.totalorder %s33, 1
      %p428 = por %p426, %p427
      %p429 = scmp.ne.s32.totalorder %s420, %s421
      %p430 = scmp.eq.s32.totalorder %s33, 0
      %p431 = por %p429, %p430
      %p432 = scmp.ne.s32.totalorder %s420, %s421
      %p433 = scmp.eq.s32.totalorder %s34, 1
      %p434 = por %p432, %p433
      %p436 = scmp.ne.s32.totalorder %s421, %s435
      %p437 = scmp.eq.s32.totalorder %s34, 0
      %p438 = por %p436, %p437
      %s440 = sadd.s32 %s439, 1
      %p443 = scmp.eq.s32.totalorder %s28, 1
      %p444 = scmp.ne.s32.totalorder %s439, %s441
      %p445 = scmp.eq.s32.totalorder %s28, 0
      %p446 = por %p444, %p445
      %p447 = scmp.ne.s32.totalorder %s439, %s441
      %p448 = scmp.eq.s32.totalorder %s33, 1
      %p449 = por %p447, %p448
      %p450 = scmp.ne.s32.totalorder %s441, %s442
      %p451 = scmp.eq.s32.totalorder %s33, 0
      %p452 = por %p450, %p451
      %p453 = scmp.ne.s32.totalorder %s441, %s442
      %p454 = scmp.eq.s32.totalorder %s34, 1
      %p455 = por %p453, %p454
      %p457 = scmp.ne.s32.totalorder %s442, %s456
      %p458 = scmp.eq.s32.totalorder %s34, 0
      %p459 = por %p457, %p458
      %s461 = sadd.s32 %s460, 1
      %p464 = scmp.eq.s32.totalorder %s28, 1
      %p465 = scmp.ne.s32.totalorder %s460, %s462
      %p466 = scmp.eq.s32.totalorder %s28, 0
      %p467 = por %p465, %p466
      %p468 = scmp.ne.s32.totalorder %s460, %s462
      %p469 = scmp.eq.s32.totalorder %s33, 1
      %p470 = por %p468, %p469
      %p471 = scmp.ne.s32.totalorder %s462, %s463
      %p472 = scmp.eq.s32.totalorder %s33, 0
      %p473 = por %p471, %p472
      %p474 = scmp.ne.s32.totalorder %s462, %s463
      %p475 = scmp.eq.s32.totalorder %s34, 1
      %p476 = por %p474, %p475
      %p478 = scmp.ne.s32.totalorder %s463, %s477
      %p479 = scmp.eq.s32.totalorder %s34, 0
      %p480 = por %p478, %p479
      %s482 = sadd.s32 %s481, 1
      %p485 = scmp.eq.s32.totalorder %s28, 1
      %p486 = scmp.ne.s32.totalorder %s481, %s483
      %p487 = scmp.eq.s32.totalorder %s28, 0
      %p488 = por %p486, %p487
      %p489 = scmp.ne.s32.totalorder %s481, %s483
      %p490 = scmp.eq.s32.totalorder %s33, 1
      %p491 = por %p489, %p490
      %p492 = scmp.ne.s32.totalorder %s483, %s484
      %p493 = scmp.eq.s32.totalorder %s33, 0
      %p494 = por %p492, %p493
      %p495 = scmp.ne.s32.totalorder %s483, %s484
      %p496 = scmp.eq.s32.totalorder %s34, 1
      %p497 = por %p495, %p496
      %p499 = scmp.ne.s32.totalorder %s484, %s498
      %p500 = scmp.eq.s32.totalorder %s34, 0
      %p501 = por %p499, %p500
      %s502 = ssub.s32 %s28, %s35
      %p503 = scmp.eq.s32.totalorder %s502, 0
      %s505 = sadd.s32 %s504, 1
      %s506 = scalar_select %p503, %s504, %s505
      %p509 = pneg %p503
      %p510 = scmp.eq.s32.totalorder %s28, 1
      %p511 = por %p509, %p510
      %p512 = scmp.ne.s32.totalorder %s504, %s507
      %p513 = scmp.eq.s32.totalorder %s28, 0
      %p514 = por %p512, %p513
      %p515 = scmp.ne.s32.totalorder %s504, %s507
      %p516 = scmp.eq.s32.totalorder %s33, 1
      %p517 = por %p515, %p516
      %p518 = scmp.ne.s32.totalorder %s507, %s508
      %p519 = scmp.eq.s32.totalorder %s33, 0
      %p520 = por %p518, %p519
      %p521 = scmp.ne.s32.totalorder %s507, %s508
      %p522 = scmp.eq.s32.totalorder %s34, 1
      %p523 = por %p521, %p522
      %p525 = scmp.ne.s32.totalorder %s508, %s524
      %p526 = scmp.eq.s32.totalorder %s34, 0
      %p527 = por %p525, %p526
      %p528 = scmp.le.s32.totalorder 1, %s28
      %p529 = scmp.lt.s32.totalorder %s28, 3
      %p530 = pnand %p528, %p529
      %p531 = pneg %p530
      // Predicated region
      $region9: #{tpu_custom_call.1} parent=5 // pred_check
        _
      $region10: #{tpu_custom_call.1} parent=5 // pred_check_branch
        %533 = sbr.rel (%p530) target = $region12
      $region11: #{tpu_custom_call.1} parent=5 // pred_region
        %s534 = ssub.s32 %s28, 1
        // Predicated region
        $region13: #{tpu_custom_call.1} parent=11 // pred_check
          %p535 = pneg %p49
        $region14: #{tpu_custom_call.1} parent=11 // pred_check_branch
          %537 = sbr.rel (%p535) target = $region16
        $region15: #{tpu_custom_call.1} parent=11 // pred_region
          %s539 = ssub.s32 32, 32
          %540 = vsyncadd [#allocation3], %s539
          %s542 = sshll.u32 %s0, 4
          %s543 = int_to_ptr.vmem [resolvable:$true] %s542
          %545 = dma.vmem_to_smem %s543, 32, [#allocation2], [#allocation3]
        $region16: #{tpu_custom_call.1} parent=11 // pred_fallthru
          _
        // Predicated region
        $region17: #{tpu_custom_call.1} parent=11 // pred_check
          %p546 = pneg %p200
        $region18: #{tpu_custom_call.1} parent=11 // pred_check_branch
          %548 = sbr.rel (%p546) target = $region20
        $region19: #{tpu_custom_call.1} parent=11 // pred_region
          _
        $region20: #{tpu_custom_call.1} parent=11 // pred_fallthru
          _
        // Predicated region
        $region21: #{tpu_custom_call.1} parent=11 // pred_check
          %p549 = pneg %p221
        $region22: #{tpu_custom_call.1} parent=11 // pred_check_branch
          %551 = sbr.rel (%p549) target = $region24
        $region23: #{tpu_custom_call.1} parent=11 // pred_region
          _
        $region24: #{tpu_custom_call.1} parent=11 // pred_fallthru
          _
        // Predicated region
        $region25: #{tpu_custom_call.1} parent=11 // pred_check
          %p552 = pneg %p242
        $region26: #{tpu_custom_call.1} parent=11 // pred_check_branch
          %554 = sbr.rel (%p552) target = $region28
        $region27: #{tpu_custom_call.1} parent=11 // pred_region
          _
        $region28: #{tpu_custom_call.1} parent=11 // pred_fallthru
          _
        // Predicated region
        $region29: #{tpu_custom_call.1} parent=11 // pred_check
          %p555 = pneg %p263
        $region30: #{tpu_custom_call.1} parent=11 // pred_check_branch
          %557 = sbr.rel (%p555) target = $region32
        $region31: #{tpu_custom_call.1} parent=11 // pred_region
          _
        $region32: #{tpu_custom_call.1} parent=11 // pred_fallthru
          _
        // Predicated region
        $region33: #{tpu_custom_call.1} parent=11 // pred_check
          %p558 = pneg %p284
        $region34: #{tpu_custom_call.1} parent=11 // pred_check_branch
          %560 = sbr.rel (%p558) target = $region36
        $region35: #{tpu_custom_call.1} parent=11 // pred_region
          _
        $region36: #{tpu_custom_call.1} parent=11 // pred_fallthru
          _
        // Predicated region
        $region37: #{tpu_custom_call.1} parent=11 // pred_check
          %p561 = pneg %p305
        $region38: #{tpu_custom_call.1} parent=11 // pred_check_branch
          %563 = sbr.rel (%p561) target = $region40
        $region39: #{tpu_custom_call.1} parent=11 // pred_region
          _
        $region40: #{tpu_custom_call.1} parent=11 // pred_fallthru
          _
        // Predicated region
        $region41: #{tpu_custom_call.1} parent=11 // pred_check
          %p564 = pneg %p326
        $region42: #{tpu_custom_call.1} parent=11 // pred_check_branch
          %566 = sbr.rel (%p564) target = $region44
        $region43: #{tpu_custom_call.1} parent=11 // pred_region
          _
        $region44: #{tpu_custom_call.1} parent=11 // pred_fallthru
          _
        // Predicated region
        $region45: #{tpu_custom_call.1} parent=11 // pred_check
          %p567 = pneg %p347
        $region46: #{tpu_custom_call.1} parent=11 // pred_check_branch
          %569 = sbr.rel (%p567) target = $region48
        $region47: #{tpu_custom_call.1} parent=11 // pred_region
          _
        $region48: #{tpu_custom_call.1} parent=11 // pred_fallthru
          _
        // Predicated region
        $region49: #{tpu_custom_call.1} parent=11 // pred_check
          %p570 = pneg %p368
        $region50: #{tpu_custom_call.1} parent=11 // pred_check_branch
          %572 = sbr.rel (%p570) target = $region52
        $region51: #{tpu_custom_call.1} parent=11 // pred_region
          _
        $region52: #{tpu_custom_call.1} parent=11 // pred_fallthru
          _
        // Predicated region
        $region53: #{tpu_custom_call.1} parent=11 // pred_check
          %p573 = pneg %p389
        $region54: #{tpu_custom_call.1} parent=11 // pred_check_branch
          %575 = sbr.rel (%p573) target = $region56
        $region55: #{tpu_custom_call.1} parent=11 // pred_region
          _
        $region56: #{tpu_custom_call.1} parent=11 // pred_fallthru
          _
        // Predicated region
        $region57: #{tpu_custom_call.1} parent=11 // pred_check
          %p576 = pneg %p410
        $region58: #{tpu_custom_call.1} parent=11 // pred_check_branch
          %578 = sbr.rel (%p576) target = $region60
        $region59: #{tpu_custom_call.1} parent=11 // pred_region
          _
        $region60: #{tpu_custom_call.1} parent=11 // pred_fallthru
          _
        // Predicated region
        $region61: #{tpu_custom_call.1} parent=11 // pred_check
          %p579 = pneg %p431
        $region62: #{tpu_custom_call.1} parent=11 // pred_check_branch
          %581 = sbr.rel (%p579) target = $region64
        $region63: #{tpu_custom_call.1} parent=11 // pred_region
          _
        $region64: #{tpu_custom_call.1} parent=11 // pred_fallthru
          _
        // Predicated region
        $region65: #{tpu_custom_call.1} parent=11 // pred_check
          %p582 = pneg %p452
        $region66: #{tpu_custom_call.1} parent=11 // pred_check_branch
          %584 = sbr.rel (%p582) target = $region68
        $region67: #{tpu_custom_call.1} parent=11 // pred_region
          _
        $region68: #{tpu_custom_call.1} parent=11 // pred_fallthru
          _
        // Predicated region
        $region69: #{tpu_custom_call.1} parent=11 // pred_check
          %p585 = pneg %p473
        $region70: #{tpu_custom_call.1} parent=11 // pred_check_branch
          %587 = sbr.rel (%p585) target = $region72
        $region71: #{tpu_custom_call.1} parent=11 // pred_region
          _
        $region72: #{tpu_custom_call.1} parent=11 // pred_fallthru
          _
        // Predicated region
        $region73: #{tpu_custom_call.1} parent=11 // pred_check
          %p588 = pneg %p494
        $region74: #{tpu_custom_call.1} parent=11 // pred_check_branch
          %590 = sbr.rel (%p588) target = $region76
        $region75: #{tpu_custom_call.1} parent=11 // pred_region
          _
        $region76: #{tpu_custom_call.1} parent=11 // pred_fallthru
          _
      $region12: #{tpu_custom_call.1} parent=5 // pred_fallthru
        _
      %p591 = scmp.lt.s32.totalorder %s28, 2
      // Predicated region
      $region77: #{tpu_custom_call.1} parent=5 // pred_check
        %p592 = pneg %p591
      $region78: #{tpu_custom_call.1} parent=5 // pred_check_branch
        %594 = sbr.rel (%p592) target = $region80
      $region79: #{tpu_custom_call.1} parent=5 // pred_region
        // Predicated region
        $region81: #{tpu_custom_call.1} parent=79 // pred_check
          %p595 = pneg %p69
        $region82: #{tpu_custom_call.1} parent=79 // pred_check_branch
          %597 = sbr.rel (%p595) target = $region84
        $region83: #{tpu_custom_call.1} parent=79 // pred_region
          %p598 = scmp.lt.s32.totalorder %s28, 1
          %s599 = scalar_select %p598, %s28, 1
          %s600 = smul.addr %s599, 8
          %s601 = smul.addr %s600, 8
          %s602 = scalar_lea.vmem %s1, %s601
        $region84: #{tpu_custom_call.1} parent=79 // pred_fallthru
          _
        // Predicated region
        $region85: #{tpu_custom_call.1} parent=79 // pred_check
          %p603 = pneg %p95
        $region86: #{tpu_custom_call.1} parent=79 // pred_check_branch
          %605 = sbr.rel (%p603) target = $region88
        $region87: #{tpu_custom_call.1} parent=79 // pred_region
          %p606 = scmp.lt.s32.totalorder %s28, 1
          %s607 = scalar_select %p606, %s28, 1
          %s608 = smul.addr %s607, 8
          %s609 = smul.addr %s608, 8
          %s610 = scalar_lea.vmem %s2, %s609
        $region88: #{tpu_custom_call.1} parent=79 // pred_fallthru
          _
        // Predicated region
        $region89: #{tpu_custom_call.1} parent=79 // pred_check
          %p611 = pneg %p121
        $region90: #{tpu_custom_call.1} parent=79 // pred_check_branch
          %613 = sbr.rel (%p611) target = $region92
        $region91: #{tpu_custom_call.1} parent=79 // pred_region
          %p614 = scmp.lt.s32.totalorder %s28, 1
          %s615 = scalar_select %p614, %s28, 1
          %s616 = smul.addr %s615, 8
          %s617 = smul.addr %s616, 8
          %s618 = scalar_lea.vmem %s3, %s617
        $region92: #{tpu_custom_call.1} parent=79 // pred_fallthru
          _
        // Predicated region
        $region93: #{tpu_custom_call.1} parent=79 // pred_check
          %p619 = pneg %p147
        $region94: #{tpu_custom_call.1} parent=79 // pred_check_branch
          %621 = sbr.rel (%p619) target = $region96
        $region95: #{tpu_custom_call.1} parent=79 // pred_region
          %p622 = scmp.lt.s32.totalorder %s28, 1
          %s623 = scalar_select %p622, %s28, 1
          %s624 = smul.addr %s623, 4
          %s625 = scalar_lea.vmem %s4, %s624
        $region96: #{tpu_custom_call.1} parent=79 // pred_fallthru
          _
        // Predicated region
        $region97: #{tpu_custom_call.1} parent=79 // pred_check
          %p626 = pneg %p173
        $region98: #{tpu_custom_call.1} parent=79 // pred_check_branch
          %628 = sbr.rel (%p626) target = $region100
        $region99: #{tpu_custom_call.1} parent=79 // pred_region
          %p629 = scmp.lt.s32.totalorder %s28, 1
          %s630 = scalar_select %p629, %s28, 1
          %s631 = smul.addr %s630, 8
          %s632 = smul.addr %s631, 8
          %s633 = scalar_lea.vmem %s5, %s632
        $region100: #{tpu_custom_call.1} parent=79 // pred_fallthru
          _
      $region80: #{tpu_custom_call.1} parent=5 // pred_fallthru
        _
      %p634 = scmp.le.s32.totalorder 1, %s28
      %p635 = scmp.lt.s32.totalorder %s28, 3
      %p636 = pnand %p634, %p635
      %p637 = pneg %p636
      // Predicated region
      $region101: #{tpu_custom_call.1} parent=5 // pred_check
        _
      $region102: #{tpu_custom_call.1} parent=5 // pred_check_branch
        %639 = sbr.rel (%p636) target = $region104
      $region103: #{tpu_custom_call.1} parent=5 // pred_region
        %s640 = ssub.s32 %s28, 1
        // Predicated region
        $region105: #{tpu_custom_call.1} parent=103 // pred_check
          %p641 = pneg %p49
        $region106: #{tpu_custom_call.1} parent=103 // pred_check_branch
          %643 = sbr.rel (%p641) target = $region108
        $region107: #{tpu_custom_call.1} parent=103 // pred_region
          %644 = dma.done [#allocation3], 32
        $region108: #{tpu_custom_call.1} parent=103 // pred_fallthru
          _
        %645 = sfence
        %p646 = pneg %p49
        %p647 = pneg %p46
        %p648 = scmp.lt.s32.totalorder %s33, 1
        %s649 = scalar_select %p648, %s33, 1
        %s650 = smul.addr %s649, 8
        %s651 = smul.addr %s650, 8
        %s652 = scalar_lea.vmem %s1, %s651
        %p653 = pneg %p75
        %p654 = pneg %p72
        %p655 = scmp.lt.s32.totalorder %s33, 1
        %s656 = scalar_select %p655, %s33, 1
        %s657 = smul.addr %s656, 8
        %s658 = smul.addr %s657, 8
        %s659 = scalar_lea.vmem %s2, %s658
        %p660 = pneg %p101
        %p661 = pneg %p98
        %p662 = scmp.lt.s32.totalorder %s33, 1
        %s663 = scalar_select %p662, %s33, 1
        %s664 = smul.addr %s663, 8
        %s665 = smul.addr %s664, 8
        %s666 = scalar_lea.vmem %s3, %s665
        %p667 = pneg %p127
        %p668 = pneg %p124
        %p669 = scmp.lt.s32.totalorder %s33, 1
        %s670 = scalar_select %p669, %s33, 1
        %s671 = smul.addr %s670, 4
        %s672 = scalar_lea.vmem %s4, %s671
        %p673 = pneg %p153
        %p674 = pneg %p150
        %p675 = scmp.lt.s32.totalorder %s33, 1
        %s676 = scalar_select %p675, %s33, 1
        %s677 = smul.addr %s676, 8
        %s678 = smul.addr %s677, 8
        %s679 = scalar_lea.vmem %s5, %s678
        %p680 = pneg %p179
        %p681 = pneg %p176
        %p682 = pneg %p200
        %p683 = pneg %p197
        %p684 = pneg %p221
        %p685 = pneg %p218
        %p686 = pneg %p242
        %p687 = pneg %p239
        %p688 = pneg %p263
        %p689 = pneg %p260
        %p690 = pneg %p284
        %p691 = pneg %p281
        %p692 = pneg %p305
        %p693 = pneg %p302
        %p694 = pneg %p326
        %p695 = pneg %p323
        %p696 = pneg %p347
        %p697 = pneg %p344
        %p698 = pneg %p368
        %p699 = pneg %p365
        %p700 = pneg %p389
        %p701 = pneg %p386
        %p702 = pneg %p410
        %p703 = pneg %p407
        %p704 = pneg %p431
        %p705 = pneg %p428
        %p706 = pneg %p452
        %p707 = pneg %p449
        %p708 = pneg %p473
        %p709 = pneg %p470
        %p710 = pneg %p494
        %p711 = pneg %p491
        %p712 = pneg %p520
        %p713 = pneg %p517
        %p714 = scmp.lt.s32.totalorder %s33, 1
        %s715 = scalar_select %p714, %s33, 1
        %s716 = smul.addr %s715, 4
        %s717 = scalar_lea.vmem %s21, %s716
        %p718 = scmp.lt.s32.totalorder %s33, 1
        %s719 = scalar_select %p718, %s33, 1
        %s720 = smul.addr %s719, 8
        %s721 = smul.addr %s720, 8
        %s722 = scalar_lea.vmem %s1, %s721
        %p723 = scmp.lt.s32.totalorder %s33, 1
        %s724 = scalar_select %p723, %s33, 1
        %s725 = smul.addr %s724, 8
        %s726 = smul.addr %s725, 8
        %s727 = scalar_lea.vmem %s2, %s726
        %p728 = scmp.lt.s32.totalorder %s33, 1
        %s729 = scalar_select %p728, %s33, 1
        %s730 = smul.addr %s729, 8
        %s731 = smul.addr %s730, 8
        %s732 = scalar_lea.vmem %s3, %s731
        %p733 = scmp.lt.s32.totalorder %s33, 1
        %s734 = scalar_select %p733, %s33, 1
        %s735 = smul.addr %s734, 4
        %s736 = scalar_lea.vmem %s4, %s735
        %p737 = scmp.lt.s32.totalorder %s33, 1
        %s738 = scalar_select %p737, %s33, 1
        %s739 = smul.addr %s738, 8
        %s740 = smul.addr %s739, 8
        %s741 = scalar_lea.vmem %s5, %s740
        %p742 = scmp.lt.s32.totalorder %s33, 1
        %s743 = scalar_select %p742, %s33, 1
        %s744 = smul.addr %s743, 4
        %s745 = scalar_lea.vmem %s21, %s744
        %s746 = smul.u32 %s33, 128
        %s747 = sld [smem:[#allocation2 + %s746]]
        %s748 = sadd.s32 %s746, 1
        %s749 = sld [smem:[#allocation2 + %s748]]
        %s750 = sadd.s32 %s746, 2
        %s751 = sld [smem:[#allocation2 + %s750]]
        %v752 = vld [vmem:[%s722] sm:$0xff]
        %v753 = vld [vmem:[%s722 + $0x8] sm:$0xff]
        %v754 = vld [vmem:[%s722 + $0x10] sm:$0xff]
        %v755 = vld [vmem:[%s722 + $0x18] sm:$0xff]
        %v756 = vld [vmem:[%s722 + $0x20] sm:$0xff]
        %v757 = vld [vmem:[%s722 + $0x28] sm:$0xff]
        %v758 = vld [vmem:[%s722 + $0x30] sm:$0xff]
        %v759 = vld [vmem:[%s722 + $0x38] sm:$0xff]
        %v760 = vld [vmem:[%s6] sm:$0x7f]
        %v761 = vld [vmem:[%s7] sm:$0x1]
        %v763 = vlaneseq
        %v764 = vshrl.u32 %v763, 7
        %v765 = vsub.s32 0, %v764
        %v766 = vrot.slane %v761, %v765
        %vm768 = vcmask 56320
        %v770 = vsel %vm768, %v752, 0
        %v773 = vsel %vm768, %v753, 0
        %v776 = vsel %vm768, %v754, 0
        %v779 = vsel %vm768, %v755, 0
        %v782 = vsel %vm768, %v756, 0
        %v785 = vsel %vm768, %v757, 0
        %v788 = vsel %vm768, %v758, 0
        %v791 = vsel %vm768, %v759, 0
        %vm793 = vcmask 1046528
        %v795 = vsel %vm793, %v760, 0
        %797 = vmatprep.subr.mxu0 0.0
        %798 = vmatpush1.msra.mxu0 %v795
        %799 = vmatprep.subr.mxu0 0.0
        %800 = vmatpush1.msra.mxu0 0.0
        %801 = vmatprep.subr.mxu0 0.0
        %802 = vmatpush1.msra.mxu0 0.0
        %803 = vmatprep.subr.mxu0 0.0
        %804 = vmatpush1.msra.mxu0 0.0
        %805 = vmatprep.subr.mxu0 0.0
        %806 = vmatpush1.msra.mxu0 0.0
        %807 = vmatprep.subr.mxu0 0.0
        %808 = vmatpush1.msra.mxu0 0.0
        %809 = vmatprep.subr.mxu0 0.0
        %810 = vmatpush1.msra.mxu0 0.0
        %811 = vmatprep.subr.mxu0 0.0
        %812 = vmatpush1.msra.mxu0 0.0
        %813 = vmatprep.subr.mxu0 0.0
        %814 = vmatpush1.msra.mxu0 0.0
        %815 = vmatprep.subr.mxu0 0.0
        %816 = vmatpush1.msra.mxu0 0.0
        %817 = vmatprep.subr.mxu0 0.0
        %818 = vmatpush1.msra.mxu0 0.0
        %819 = vmatprep.subr.mxu0 0.0
        %820 = vmatpush1.msra.mxu0 0.0
        %821 = vmatprep.subr.mxu0 0.0
        %822 = vmatpush1.msra.mxu0 0.0
        %823 = vmatprep.subr.mxu0 0.0
        %824 = vmatpush1.msra.mxu0 0.0
        %825 = vmatprep.subr.mxu0 0.0
        %826 = vmatpush1.msra.mxu0 0.0
        %827 = vmatprep.subr.mxu0 0.0
        %828 = vmatpush1.msra.mxu0 0.0
        %829 = vmatprep.subr.mxu0 0.0
        %830 = vmatpush1.msra.mxu0 0.0
        %831 = vmatprep.subr.mxu0 0.0
        %832 = vmatpush1.msra.mxu0 0.0
        %833 = vmatprep.subr.mxu0 0.0
        %834 = vmatpush1.msra.mxu0 0.0
        %835 = vmatprep.subr.mxu0 0.0
        %836 = vmatpush1.msra.mxu0 0.0
        %837 = vmatprep.subr.mxu0 0.0
        %838 = vmatpush1.msra.mxu0 0.0
        %839 = vmatprep.subr.mxu0 0.0
        %840 = vmatpush1.msra.mxu0 0.0
        %841 = vmatprep.subr.mxu0 0.0
        %842 = vmatpush1.msra.mxu0 0.0
        %843 = vmatprep.subr.mxu0 0.0
        %844 = vmatpush1.msra.mxu0 0.0
        %845 = vmatprep.subr.mxu0 0.0
        %846 = vmatpush1.msra.mxu0 0.0
        %847 = vmatprep.subr.mxu0 0.0
        %848 = vmatpush1.msra.mxu0 0.0
        %849 = vmatprep.subr.mxu0 0.0
        %850 = vmatpush1.msra.mxu0 0.0
        %851 = vmatprep.subr.mxu0 0.0
        %852 = vmatpush1.msra.mxu0 0.0
        %853 = vmatprep.subr.mxu0 0.0
        %854 = vmatpush1.msra.mxu0 0.0
        %855 = vmatprep.subr.mxu0 0.0
        %856 = vmatpush1.msra.mxu0 0.0
        %857 = vmatprep.subr.mxu0 0.0
        %858 = vmatpush1.msra.mxu0 0.0
        %859 = vmatprep.subr.mxu0 0.0
        %860 = vmatpush1.msra.mxu0 0.0
        %861 = vmatprep.mubr.f32.mxu0 0.0
        %862 = vmatmul.mubr.f32.gmra.mrb[0].mxu0 %v770
        %v863 = vpop.f32.mrb[0].mxu0
        %v864 = vadd.f32 %v766, %v863
        %v865 = vpop.f32.mrb[0].mxu0
        %866 = vmatprep.mubr.f32.mxu0 0.0
        %867 = vmatmul.mubr.f32.gmra.mrb[0].mxu0 %v773
        %v868 = vpop.f32.mrb[0].mxu0
        %v869 = vadd.f32 %v766, %v868
        %v870 = vpop.f32.mrb[0].mxu0
        %871 = vmatprep.mubr.f32.mxu0 0.0
        %872 = vmatmul.mubr.f32.gmra.mrb[0].mxu0 %v776
        %v873 = vpop.f32.mrb[0].mxu0
        %v874 = vadd.f32 %v766, %v873
        %v875 = vpop.f32.mrb[0].mxu0
        %876 = vmatprep.mubr.f32.mxu0 0.0
        %877 = vmatmul.mubr.f32.gmra.mrb[0].mxu0 %v779
        %v878 = vpop.f32.mrb[0].mxu0
        %v879 = vadd.f32 %v766, %v878
        %v880 = vpop.f32.mrb[0].mxu0
        %881 = vmatprep.mubr.f32.mxu0 0.0
        %882 = vmatmul.mubr.f32.gmra.mrb[0].mxu0 %v782
        %v883 = vpop.f32.mrb[0].mxu0
        %v884 = vadd.f32 %v766, %v883
        %v885 = vpop.f32.mrb[0].mxu0
        %886 = vmatprep.mubr.f32.mxu0 0.0
        %887 = vmatmul.mubr.f32.gmra.mrb[0].mxu0 %v785
        %v888 = vpop.f32.mrb[0].mxu0
        %v889 = vadd.f32 %v766, %v888
        %v890 = vpop.f32.mrb[0].mxu0
        %891 = vmatprep.mubr.f32.mxu0 0.0
        %892 = vmatmul.mubr.f32.gmra.mrb[0].mxu0 %v788
        %v893 = vpop.f32.mrb[0].mxu0
        %v894 = vadd.f32 %v766, %v893
        %v895 = vpop.f32.mrb[0].mxu0
        %896 = vmatprep.mubr.f32.mxu0 0.0
        %897 = vmatmul.mubr.f32.gmra.mrb[0].mxu0 %v791
        %v898 = vpop.f32.mrb[0].mxu0
        %v899 = vadd.f32 %v766, %v898
        %v900 = vpop.f32.mrb[0].mxu0
        %901 = vdwg.mxu0
        %v902 = vmax.f32 %v864, 0.0
        %v903 = vmax.f32 %v869, 0.0
        %v904 = vmax.f32 %v874, 0.0
        %v905 = vmax.f32 %v879, 0.0
        %v906 = vmax.f32 %v884, 0.0
        %v907 = vmax.f32 %v889, 0.0
        %v908 = vmax.f32 %v894, 0.0
        %v909 = vmax.f32 %v899, 0.0
        %v910 = vld [vmem:[%s8] sm:$0xff]
        %v911 = vld [vmem:[%s8 + $0x8] sm:$0xff]
        %v912 = vld [vmem:[%s8 + $0x10] sm:$0xff]
        %v913 = vld [vmem:[%s8 + $0x18] sm:$0xff]
        %v914 = vld [vmem:[%s9] sm:$0x1]
        %v916 = vlaneseq
        %v917 = vshrl.u32 %v916, 7
        %v918 = vsub.s32 0, %v917
        %v919 = vrot.slane %v914, %v918
        %vm921 = vcmask 261120
        %v923 = vsel %vm921, %v902, 0
        %v926 = vsel %vm921, %v903, 0
        %v929 = vsel %vm921, %v904, 0
        %v932 = vsel %vm921, %v905, 0
        %v935 = vsel %vm921, %v906, 0
        %v938 = vsel %vm921, %v907, 0
        %v941 = vsel %vm921, %v908, 0
        %v944 = vsel %vm921, %v909, 0
        %946 = vmatprep.subr.mxu0 0.0
        %947 = vmatpush1.msra.mxu0 %v910
        %948 = vmatprep.subr.mxu0 0.0
        %949 = vmatpush1.msra.mxu0 %v911
        %950 = vmatprep.subr.mxu0 0.0
        %951 = vmatpush1.msra.mxu0 %v912
        %952 = vmatprep.subr.mxu0 0.0
        %953 = vmatpush1.msra.mxu0 %v913
        %954 = vmatprep.subr.mxu0 0.0
        %955 = vmatpush1.msra.mxu0 0.0
        %956 = vmatprep.subr.mxu0 0.0
        %957 = vmatpush1.msra.mxu0 0.0
        %958 = vmatprep.subr.mxu0 0.0
        %959 = vmatpush1.msra.mxu0 0.0
        %960 = vmatprep.subr.mxu0 0.0
        %961 = vmatpush1.msra.mxu0 0.0
        %962 = vmatprep.subr.mxu0 0.0
        %963 = vmatpush1.msra.mxu0 0.0
        %964 = vmatprep.subr.mxu0 0.0
        %965 = vmatpush1.msra.mxu0 0.0
        %966 = vmatprep.subr.mxu0 0.0
        %967 = vmatpush1.msra.mxu0 0.0
        %968 = vmatprep.subr.mxu0 0.0
        %969 = vmatpush1.msra.mxu0 0.0
        %970 = vmatprep.subr.mxu0 0.0
        %971 = vmatpush1.msra.mxu0 0.0
        %972 = vmatprep.subr.mxu0 0.0
        %973 = vmatpush1.msra.mxu0 0.0
        %974 = vmatprep.subr.mxu0 0.0
        %975 = vmatpush1.msra.mxu0 0.0
        %976 = vmatprep.subr.mxu0 0.0
        %977 = vmatpush1.msra.mxu0 0.0
        %978 = vmatprep.subr.mxu0 0.0
        %979 = vmatpush1.msra.mxu0 0.0
        %980 = vmatprep.subr.mxu0 0.0
        %981 = vmatpush1.msra.mxu0 0.0
        %982 = vmatprep.subr.mxu0 0.0
        %983 = vmatpush1.msra.mxu0 0.0
        %984 = vmatprep.subr.mxu0 0.0
        %985 = vmatpush1.msra.mxu0 0.0
        %986 = vmatprep.subr.mxu0 0.0
        %987 = vmatpush1.msra.mxu0 0.0
        %988 = vmatprep.subr.mxu0 0.0
        %989 = vmatpush1.msra.mxu0 0.0
        %990 = vmatprep.subr.mxu0 0.0
        %991 = vmatpush1.msra.mxu0 0.0
        %992 = vmatprep.subr.mxu0 0.0
        %993 = vmatpush1.msra.mxu0 0.0
        %994 = vmatprep.subr.mxu0 0.0
        %995 = vmatpush1.msra.mxu0 0.0
        %996 = vmatprep.subr.mxu0 0.0
        %997 = vmatpush1.msra.mxu0 0.0
        %998 = vmatprep.subr.mxu0 0.0
        %999 = vmatpush1.msra.mxu0 0.0
        %1000 = vmatprep.subr.mxu0 0.0
        %1001 = vmatpush1.msra.mxu0 0.0
        %1002 = vmatprep.subr.mxu0 0.0
        %1003 = vmatpush1.msra.mxu0 0.0
        %1004 = vmatprep.subr.mxu0 0.0
        %1005 = vmatpush1.msra.mxu0 0.0
        %1006 = vmatprep.subr.mxu0 0.0
        %1007 = vmatpush1.msra.mxu0 0.0
        %1008 = vmatprep.subr.mxu0 0.0
        %1009 = vmatpush1.msra.mxu0 0.0
        %1010 = vmatprep.mubr.f32.mxu0 0.0
        %1011 = vmatmul.mubr.f32.gmra.mrb[0].mxu0 %v923
        %v1012 = vpop.f32.mrb[0].mxu0
        %v1013 = vadd.f32 %v919, %v1012
        %v1014 = vpop.f32.mrb[0].mxu0
        %1015 = vmatprep.mubr.f32.mxu0 0.0
        %1016 = vmatmul.mubr.f32.gmra.mrb[0].mxu0 %v926
        %v1017 = vpop.f32.mrb[0].mxu0
        %v1018 = vadd.f32 %v919, %v1017
        %v1019 = vpop.f32.mrb[0].mxu0
        %1020 = vmatprep.mubr.f32.mxu0 0.0
        %1021 = vmatmul.mubr.f32.gmra.mrb[0].mxu0 %v929
        %v1022 = vpop.f32.mrb[0].mxu0
        %v1023 = vadd.f32 %v919, %v1022
        %v1024 = vpop.f32.mrb[0].mxu0
        %1025 = vmatprep.mubr.f32.mxu0 0.0
        %1026 = vmatmul.mubr.f32.gmra.mrb[0].mxu0 %v932
        %v1027 = vpop.f32.mrb[0].mxu0
        %v1028 = vadd.f32 %v919, %v1027
        %v1029 = vpop.f32.mrb[0].mxu0
        %1030 = vmatprep.mubr.f32.mxu0 0.0
        %1031 = vmatmul.mubr.f32.gmra.mrb[0].mxu0 %v935
        %v1032 = vpop.f32.mrb[0].mxu0
        %v1033 = vadd.f32 %v919, %v1032
        %v1034 = vpop.f32.mrb[0].mxu0
        %1035 = vmatprep.mubr.f32.mxu0 0.0
        %1036 = vmatmul.mubr.f32.gmra.mrb[0].mxu0 %v938
        %v1037 = vpop.f32.mrb[0].mxu0
        %v1038 = vadd.f32 %v919, %v1037
        %v1039 = vpop.f32.mrb[0].mxu0
        %1040 = vmatprep.mubr.f32.mxu0 0.0
        %1041 = vmatmul.mubr.f32.gmra.mrb[0].mxu0 %v941
        %v1042 = vpop.f32.mrb[0].mxu0
        %v1043 = vadd.f32 %v919, %v1042
        %v1044 = vpop.f32.mrb[0].mxu0
        %1045 = vmatprep.mubr.f32.mxu0 0.0
        %1046 = vmatmul.mubr.f32.gmra.mrb[0].mxu0 %v944
        %v1047 = vpop.f32.mrb[0].mxu0
        %v1048 = vadd.f32 %v919, %v1047
        %v1049 = vpop.f32.mrb[0].mxu0
        %1050 = vdwg.mxu0
        %1051 = vrot.lane.b32.xlu0 %v752, 125
        %v1052 = vpop.permute.xlu0 %1051
        %1053 = vrot.lane.b32.xlu0 %v753, 125
        %v1054 = vpop.permute.xlu0 %1053
        %1055 = vrot.lane.b32.xlu0 %v754, 125
        %v1056 = vpop.permute.xlu0 %1055
        %1057 = vrot.lane.b32.xlu0 %v755, 125
        %v1058 = vpop.permute.xlu0 %1057
        %1059 = vrot.lane.b32.xlu0 %v756, 125
        %v1060 = vpop.permute.xlu0 %1059
        %1061 = vrot.lane.b32.xlu0 %v757, 125
        %v1062 = vpop.permute.xlu0 %1061
        %1063 = vrot.lane.b32.xlu0 %v758, 125
        %v1064 = vpop.permute.xlu0 %1063
        %1065 = vrot.lane.b32.xlu0 %v759, 125
        %v1066 = vpop.permute.xlu0 %1065
        %1075 = vxpose.xlu0.b32.start [1/16] %v1052, 128
        %1076 = vxpose.xlu0.b32.cont [2/16] %v1054, 128
        %1077 = vxpose.xlu0.b32.cont [3/16] %v1056, 128
        %1078 = vxpose.xlu0.b32.cont [4/16] %v1058, 128
        %1079 = vxpose.xlu0.b32.cont [5/16] %v1060, 128
        %1080 = vxpose.xlu0.b32.cont [6/16] %v1062, 128
        %1081 = vxpose.xlu0.b32.cont [7/16] %v1064, 128
        %1082 = vxpose.xlu0.b32.cont [8/16] %v1066, 128
        %1083 = vxpose.xlu0.b32.cont [9/16] 0.0, 128
        %1084 = vxpose.xlu0.b32.cont [10/16] 0.0, 128
        %1085 = vxpose.xlu0.b32.cont [11/16] 0.0, 128
        %1086 = vxpose.xlu0.b32.cont [12/16] 0.0, 128
        %1087 = vxpose.xlu0.b32.cont [13/16] 0.0, 128
        %1088 = vxpose.xlu0.b32.cont [14/16] 0.0, 128
        %1089 = vxpose.xlu0.b32.cont [15/16] 0.0, 128
        %1090 = vxpose.xlu0.b32.end [16/16] 0.0, 128
        %v1091 = vpop.trf.xlu0
        %v1092 = vpop.trf.xlu0
        %v1093 = vpop.trf.xlu0
        %v1094 = vpop.trf.xlu0
        %v1095 = vpop.trf.xlu0
        %v1096 = vpop.trf.xlu0
        %v1097 = vpop.trf.xlu0
        %v1098 = vpop.trf.xlu0
        %v1099 = vpop.trf.xlu0
        %v1100 = vpop.trf.xlu0
        %v1101 = vpop.trf.xlu0
        %v1102 = vpop.trf.xlu0
        %v1103 = vpop.trf.xlu0
        %v1104 = vpop.trf.xlu0
        %v1105 = vpop.trf.xlu0
        %v1106 = vpop.trf.xlu0
        %vm1107 = vcmask 523264
        %v1109 = vsel %vm1107, %v1091, 0
        %1111 = vmatprep.subr.mxu0 0.0
        %1112 = vmatpush1.msra.mxu0 %v1013
        %1113 = vmatprep.subr.mxu0 0.0
        %1114 = vmatpush1.msra.mxu0 %v1018
        %1115 = vmatprep.subr.mxu0 0.0
        %1116 = vmatpush1.msra.mxu0 %v1023
        %1117 = vmatprep.subr.mxu0 0.0
        %1118 = vmatpush1.msra.mxu0 %v1028
        %1119 = vmatprep.subr.mxu0 0.0
        %1120 = vmatpush1.msra.mxu0 %v1033
        %1121 = vmatprep.subr.mxu0 0.0
        %1122 = vmatpush1.msra.mxu0 %v1038
        %1123 = vmatprep.subr.mxu0 0.0
        %1124 = vmatpush1.msra.mxu0 %v1043
        %1125 = vmatprep.subr.mxu0 0.0
        %1126 = vmatpush1.msra.mxu0 %v1048
        %1127 = vmatprep.subr.mxu0 0.0
        %1128 = vmatpush1.msra.mxu0 0.0
        %1129 = vmatprep.subr.mxu0 0.0
        %1130 = vmatpush1.msra.mxu0 0.0
        %1131 = vmatprep.subr.mxu0 0.0
        %1132 = vmatpush1.msra.mxu0 0.0
        %1133 = vmatprep.subr.mxu0 0.0
        %1134 = vmatpush1.msra.mxu0 0.0
        %1135 = vmatprep.subr.mxu0 0.0
        %1136 = vmatpush1.msra.mxu0 0.0
        %1137 = vmatprep.subr.mxu0 0.0
        %1138 = vmatpush1.msra.mxu0 0.0
        %1139 = vmatprep.subr.mxu0 0.0
        %1140 = vmatpush1.msra.mxu0 0.0
        %1141 = vmatprep.subr.mxu0 0.0
        %1142 = vmatpush1.msra.mxu0 0.0
        %1143 = vmatprep.subr.mxu0 0.0
        %1144 = vmatpush1.msra.mxu0 0.0
        %1145 = vmatprep.subr.mxu0 0.0
        %1146 = vmatpush1.msra.mxu0 0.0
        %1147 = vmatprep.subr.mxu0 0.0
        %1148 = vmatpush1.msra.mxu0 0.0
        %1149 = vmatprep.subr.mxu0 0.0
        %1150 = vmatpush1.msra.mxu0 0.0
        %1151 = vmatprep.subr.mxu0 0.0
        %1152 = vmatpush1.msra.mxu0 0.0
        %1153 = vmatprep.subr.mxu0 0.0
        %1154 = vmatpush1.msra.mxu0 0.0
        %1155 = vmatprep.subr.mxu0 0.0
        %1156 = vmatpush1.msra.mxu0 0.0
        %1157 = vmatprep.subr.mxu0 0.0
        %1158 = vmatpush1.msra.mxu0 0.0
        %1159 = vmatprep.subr.mxu0 0.0
        %1160 = vmatpush1.msra.mxu0 0.0
        %1161 = vmatprep.subr.mxu0 0.0
        %1162 = vmatpush1.msra.mxu0 0.0
        %1163 = vmatprep.subr.mxu0 0.0
        %1164 = vmatpush1.msra.mxu0 0.0
        %1165 = vmatprep.subr.mxu0 0.0
        %1166 = vmatpush1.msra.mxu0 0.0
        %1167 = vmatprep.subr.mxu0 0.0
        %1168 = vmatpush1.msra.mxu0 0.0
        %1169 = vmatprep.subr.mxu0 0.0
        %1170 = vmatpush1.msra.mxu0 0.0
        %1171 = vmatprep.subr.mxu0 0.0
        %1172 = vmatpush1.msra.mxu0 0.0
        %1173 = vmatprep.subr.mxu0 0.0
        %1174 = vmatpush1.msra.mxu0 0.0
        %1175 = vmatprep.mubr.f32.mxu0 0.0
        %1176 = vmatmul.mubr.f32.gmra.mrb[0].mxu0 %v1109
        %v1177 = vpop.f32.mrb[0].mxu0
        %v1178 = vadd.f32 0.0, %v1177
        %v1179 = vpop.f32.mrb[0].mxu0
        %1180 = vdwg.mxu0
        %1181 = vmatprep.subr.mxu0 0.0
        %1182 = vmatpush1.msra.mxu0 1.0
        %1183 = vmatprep.subr.mxu0 0.0
        %1184 = vmatpush1.msra.mxu0 1.0
        %1185 = vmatprep.subr.mxu0 0.0
        %1186 = vmatpush1.msra.mxu0 1.0
        %1187 = vmatprep.subr.mxu0 0.0
        %1188 = vmatpush1.msra.mxu0 1.0
        %1189 = vmatprep.subr.mxu0 0.0
        %1190 = vmatpush1.msra.mxu0 1.0
        %1191 = vmatprep.subr.mxu0 0.0
        %1192 = vmatpush1.msra.mxu0 1.0
        %1193 = vmatprep.subr.mxu0 0.0
        %1194 = vmatpush1.msra.mxu0 1.0
        %1195 = vmatprep.subr.mxu0 0.0
        %1196 = vmatpush1.msra.mxu0 1.0
        %1197 = vmatprep.subr.mxu0 0.0
        %1198 = vmatpush1.msra.mxu0 0.0
        %1199 = vmatprep.subr.mxu0 0.0
        %1200 = vmatpush1.msra.mxu0 0.0
        %1201 = vmatprep.subr.mxu0 0.0
        %1202 = vmatpush1.msra.mxu0 0.0
        %1203 = vmatprep.subr.mxu0 0.0
        %1204 = vmatpush1.msra.mxu0 0.0
        %1205 = vmatprep.subr.mxu0 0.0
        %1206 = vmatpush1.msra.mxu0 0.0
        %1207 = vmatprep.subr.mxu0 0.0
        %1208 = vmatpush1.msra.mxu0 0.0
        %1209 = vmatprep.subr.mxu0 0.0
        %1210 = vmatpush1.msra.mxu0 0.0
        %1211 = vmatprep.subr.mxu0 0.0
        %1212 = vmatpush1.msra.mxu0 0.0
        %1213 = vmatprep.subr.mxu0 0.0
        %1214 = vmatpush1.msra.mxu0 0.0
        %1215 = vmatprep.subr.mxu0 0.0
        %1216 = vmatpush1.msra.mxu0 0.0
        %1217 = vmatprep.subr.mxu0 0.0
        %1218 = vmatpush1.msra.mxu0 0.0
        %1219 = vmatprep.subr.mxu0 0.0
        %1220 = vmatpush1.msra.mxu0 0.0
        %1221 = vmatprep.subr.mxu0 0.0
        %1222 = vmatpush1.msra.mxu0 0.0
        %1223 = vmatprep.subr.mxu0 0.0
        %1224 = vmatpush1.msra.mxu0 0.0
        %1225 = vmatprep.subr.mxu0 0.0
        %1226 = vmatpush1.msra.mxu0 0.0
        %1227 = vmatprep.subr.mxu0 0.0
        %1228 = vmatpush1.msra.mxu0 0.0
        %1229 = vmatprep.subr.mxu0 0.0
        %1230 = vmatpush1.msra.mxu0 0.0
        %1231 = vmatprep.subr.mxu0 0.0
        %1232 = vmatpush1.msra.mxu0 0.0
        %1233 = vmatprep.subr.mxu0 0.0
        %1234 = vmatpush1.msra.mxu0 0.0
        %1235 = vmatprep.subr.mxu0 0.0
        %1236 = vmatpush1.msra.mxu0 0.0
        %1237 = vmatprep.subr.mxu0 0.0
        %1238 = vmatpush1.msra.mxu0 0.0
        %1239 = vmatprep.subr.mxu0 0.0
        %1240 = vmatpush1.msra.mxu0 0.0
        %1241 = vmatprep.subr.mxu0 0.0
        %1242 = vmatpush1.msra.mxu0 0.0
        %1243 = vmatprep.subr.mxu0 0.0
        %1244 = vmatpush1.msra.mxu0 0.0
        %1245 = vmatprep.mubr.f32.mxu0 0.0
        %1246 = vmatmul.mubr.f32.gmra.mrb[0].mxu0 %v1109
        %v1247 = vpop.f32.mrb[0].mxu0
        %v1248 = vadd.f32 1e-06, %v1247
        %v1249 = vpop.f32.mrb[0].mxu0
        %1250 = vdwg.mxu0
        %v1251 = vrcp.pop %v1248
        %1253 = vset.pattern.permute.xlu0 0
        %1254 = vperm.xlu0 %1253, %v1251
        %v1255 = vpop.permute.xlu0 %1254
        %v1257 = vmul.f32 %v1178, %v1255
        %v1258 = vld [vmem:[%s10] sm:$0xff]
        %v1259 = vld [vmem:[%s10 + $0x8] sm:$0xff]
        %v1260 = vld [vmem:[%s10 + $0x10] sm:$0xff]
        %v1261 = vld [vmem:[%s10 + $0x18] sm:$0xff]
        %v1262 = vld [vmem:[%s11] sm:$0x1]
        %v1264 = vlaneseq
        %v1265 = vshrl.u32 %v1264, 7
        %v1266 = vsub.s32 0, %v1265
        %v1267 = vrot.slane %v1262, %v1266
        %v1270 = vsel %vm921, %v1257, 0
        %1272 = vmatprep.subr.mxu0 0.0
        %1273 = vmatpush1.msra.mxu0 %v1258
        %1274 = vmatprep.subr.mxu0 0.0
        %1275 = vmatpush1.msra.mxu0 %v1259
        %1276 = vmatprep.subr.mxu0 0.0
        %1277 = vmatpush1.msra.mxu0 %v1260
        %1278 = vmatprep.subr.mxu0 0.0
        %1279 = vmatpush1.msra.mxu0 %v1261
        %1280 = vmatprep.subr.mxu0 0.0
        %1281 = vmatpush1.msra.mxu0 0.0
        %1282 = vmatprep.subr.mxu0 0.0
        %1283 = vmatpush1.msra.mxu0 0.0
        %1284 = vmatprep.subr.mxu0 0.0
        %1285 = vmatpush1.msra.mxu0 0.0
        %1286 = vmatprep.subr.mxu0 0.0
        %1287 = vmatpush1.msra.mxu0 0.0
        %1288 = vmatprep.subr.mxu0 0.0
        %1289 = vmatpush1.msra.mxu0 0.0
        %1290 = vmatprep.subr.mxu0 0.0
        %1291 = vmatpush1.msra.mxu0 0.0
        %1292 = vmatprep.subr.mxu0 0.0
        %1293 = vmatpush1.msra.mxu0 0.0
        %1294 = vmatprep.subr.mxu0 0.0
        %1295 = vmatpush1.msra.mxu0 0.0
        %1296 = vmatprep.subr.mxu0 0.0
        %1297 = vmatpush1.msra.mxu0 0.0
        %1298 = vmatprep.subr.mxu0 0.0
        %1299 = vmatpush1.msra.mxu0 0.0
        %1300 = vmatprep.subr.mxu0 0.0
        %1301 = vmatpush1.msra.mxu0 0.0
        %1302 = vmatprep.subr.mxu0 0.0
        %1303 = vmatpush1.msra.mxu0 0.0
        %1304 = vmatprep.subr.mxu0 0.0
        %1305 = vmatpush1.msra.mxu0 0.0
        %1306 = vmatprep.subr.mxu0 0.0
        %1307 = vmatpush1.msra.mxu0 0.0
        %1308 = vmatprep.subr.mxu0 0.0
        %1309 = vmatpush1.msra.mxu0 0.0
        %1310 = vmatprep.subr.mxu0 0.0
        %1311 = vmatpush1.msra.mxu0 0.0
        %1312 = vmatprep.subr.mxu0 0.0
        %1313 = vmatpush1.msra.mxu0 0.0
        %1314 = vmatprep.subr.mxu0 0.0
        %1315 = vmatpush1.msra.mxu0 0.0
        %1316 = vmatprep.subr.mxu0 0.0
        %1317 = vmatpush1.msra.mxu0 0.0
        %1318 = vmatprep.subr.mxu0 0.0
        %1319 = vmatpush1.msra.mxu0 0.0
        %1320 = vmatprep.subr.mxu0 0.0
        %1321 = vmatpush1.msra.mxu0 0.0
        %1322 = vmatprep.subr.mxu0 0.0
        %1323 = vmatpush1.msra.mxu0 0.0
        %1324 = vmatprep.subr.mxu0 0.0
        %1325 = vmatpush1.msra.mxu0 0.0
        %1326 = vmatprep.subr.mxu0 0.0
        %1327 = vmatpush1.msra.mxu0 0.0
        %1328 = vmatprep.subr.mxu0 0.0
        %1329 = vmatpush1.msra.mxu0 0.0
        %1330 = vmatprep.subr.mxu0 0.0
        %1331 = vmatpush1.msra.mxu0 0.0
        %1332 = vmatprep.subr.mxu0 0.0
        %1333 = vmatpush1.msra.mxu0 0.0
        %1334 = vmatprep.subr.mxu0 0.0
        %1335 = vmatpush1.msra.mxu0 0.0
        %1336 = vmatprep.mubr.f32.mxu0 0.0
        %1337 = vmatmul.mubr.f32.gmra.mrb[0].mxu0 %v1270
        %v1338 = vpop.f32.mrb[0].mxu0
        %v1339 = vadd.f32 %v1267, %v1338
        %v1340 = vpop.f32.mrb[0].mxu0
        %1341 = vdwg.mxu0
        %v1342 = vmul.f32 %v1339, 0.5
        %v1343 = vmul.f32 %v1342, 1.442695
        %v1344 = vpow.pop %v1343
        %v1345 = vld [vmem:[%s736] sm:$0xf]
        %1347 = vrot.lane.b32.xlu0 %v1345, 32
        %v1348 = vpop.permute.xlu0 %1347
        %v1350 = vmul.f32 %v1344, %v1348
        %1352 = vrot.lane.b32.xlu0 %v1350, 96
        %v1353 = vpop.permute.xlu0 %1352
        %v1355 = vadd.f32 %v1339, %v1353
        %v1356 = vmul.f32 %v1355, %v1355
        %v1357 = vsub.f32 %v1356, 1.0
        %1359 = vrot.lane.b32.xlu0 %v1339, 96
        %v1360 = vpop.permute.xlu0 %1359
        %v1362 = vsub.f32 %v1357, %v1360
        %vm1363 = vcmask 257024
        %v1364 = vsel %vm1363, %v1362, 0.0
        %1365 = vadd.xlane.f32.xlu0 %v1364
        %v1366 = vpop.xlane.xlu0 %1365
        %v1367 = vrot.slane %v1366, 4
        %v1368 = vadd.f32 %v1366, %v1367
        %v1369 = vrot.slane %v1368, 2
        %v1370 = vadd.f32 %v1368, %v1369
        %v1371 = vrot.slane %v1370, 1
        %v1372 = vadd.f32 %v1370, %v1371
        %s1373 = vtos %v1372
        %s1374 = smul.f32 %s1373, 0.5
        %v1375 = vld [vmem:[%s12] sm:$0xff]
        %v1376 = vld [vmem:[%s12 + $0x8] sm:$0xff]
        %v1377 = vld [vmem:[%s12 + $0x10] sm:$0xff]
        %v1378 = vld [vmem:[%s12 + $0x18] sm:$0xff]
        %v1379 = vld [vmem:[%s13] sm:$0x1]
        %v1381 = vlaneseq
        %v1382 = vshrl.u32 %v1381, 7
        %v1383 = vsub.s32 0, %v1382
        %v1384 = vrot.slane %v1379, %v1383
        %v1387 = vsel %vm921, %v1355, 0
        %1389 = vmatprep.subr.mxu0 0.0
        %1390 = vmatpush1.msra.mxu0 %v1375
        %1391 = vmatprep.subr.mxu0 0.0
        %1392 = vmatpush1.msra.mxu0 %v1376
        %1393 = vmatprep.subr.mxu0 0.0
        %1394 = vmatpush1.msra.mxu0 %v1377
        %1395 = vmatprep.subr.mxu0 0.0
        %1396 = vmatpush1.msra.mxu0 %v1378
        %1397 = vmatprep.subr.mxu0 0.0
        %1398 = vmatpush1.msra.mxu0 0.0
        %1399 = vmatprep.subr.mxu0 0.0
        %1400 = vmatpush1.msra.mxu0 0.0
        %1401 = vmatprep.subr.mxu0 0.0
        %1402 = vmatpush1.msra.mxu0 0.0
        %1403 = vmatprep.subr.mxu0 0.0
        %1404 = vmatpush1.msra.mxu0 0.0
        %1405 = vmatprep.subr.mxu0 0.0
        %1406 = vmatpush1.msra.mxu0 0.0
        %1407 = vmatprep.subr.mxu0 0.0
        %1408 = vmatpush1.msra.mxu0 0.0
        %1409 = vmatprep.subr.mxu0 0.0
        %1410 = vmatpush1.msra.mxu0 0.0
        %1411 = vmatprep.subr.mxu0 0.0
        %1412 = vmatpush1.msra.mxu0 0.0
        %1413 = vmatprep.subr.mxu0 0.0
        %1414 = vmatpush1.msra.mxu0 0.0
        %1415 = vmatprep.subr.mxu0 0.0
        %1416 = vmatpush1.msra.mxu0 0.0
        %1417 = vmatprep.subr.mxu0 0.0
        %1418 = vmatpush1.msra.mxu0 0.0
        %1419 = vmatprep.subr.mxu0 0.0
        %1420 = vmatpush1.msra.mxu0 0.0
        %1421 = vmatprep.subr.mxu0 0.0
        %1422 = vmatpush1.msra.mxu0 0.0
        %1423 = vmatprep.subr.mxu0 0.0
        %1424 = vmatpush1.msra.mxu0 0.0
        %1425 = vmatprep.subr.mxu0 0.0
        %1426 = vmatpush1.msra.mxu0 0.0
        %1427 = vmatprep.subr.mxu0 0.0
        %1428 = vmatpush1.msra.mxu0 0.0
        %1429 = vmatprep.subr.mxu0 0.0
        %1430 = vmatpush1.msra.mxu0 0.0
        %1431 = vmatprep.subr.mxu0 0.0
        %1432 = vmatpush1.msra.mxu0 0.0
        %1433 = vmatprep.subr.mxu0 0.0
        %1434 = vmatpush1.msra.mxu0 0.0
        %1435 = vmatprep.subr.mxu0 0.0
        %1436 = vmatpush1.msra.mxu0 0.0
        %1437 = vmatprep.subr.mxu0 0.0
        %1438 = vmatpush1.msra.mxu0 0.0
        %1439 = vmatprep.subr.mxu0 0.0
        %1440 = vmatpush1.msra.mxu0 0.0
        %1441 = vmatprep.subr.mxu0 0.0
        %1442 = vmatpush1.msra.mxu0 0.0
        %1443 = vmatprep.subr.mxu0 0.0
        %1444 = vmatpush1.msra.mxu0 0.0
        %1445 = vmatprep.subr.mxu0 0.0
        %1446 = vmatpush1.msra.mxu0 0.0
        %1447 = vmatprep.subr.mxu0 0.0
        %1448 = vmatpush1.msra.mxu0 0.0
        %1449 = vmatprep.subr.mxu0 0.0
        %1450 = vmatpush1.msra.mxu0 0.0
        %1451 = vmatprep.subr.mxu0 0.0
        %1452 = vmatpush1.msra.mxu0 0.0
        %1453 = vmatprep.mubr.f32.mxu0 0.0
        %1454 = vmatmul.mubr.f32.gmra.mrb[0].mxu0 %v1387
        %v1455 = vpop.f32.mrb[0].mxu0
        %v1456 = vadd.f32 %v1384, %v1455
        %v1457 = vpop.f32.mrb[0].mxu0
        %1458 = vdwg.mxu0
        %v1459 = vlaneseq
        %v1460 = vand.u32 %v1459, 127
        %vm1461 = vcmp.lt.s32.totalorder %v1460, 3
        %v1462 = vtanh.pop %v1456
        %v1463 = vsel %vm1461, %v1462, %v1456
        %v1464 = vmax.f32 %v1456, 0.0
        %vm1465 = vcmask 544024
        %v1466 = vsel %vm1465, %v1464, -inf
        %v1467 = vrot.slane %v1466, 4
        %v1468 = vmax.f32 %v1466, %v1467
        %v1469 = vrot.slane %v1468, 2
        %v1470 = vmax.f32 %v1468, %v1469
        %v1471 = vrot.slane %v1470, 1
        %v1472 = vmax.f32 %v1470, %v1471
        %v1473 = vld [vmem:[%s741] sm:$0xff]
        %v1474 = vld [vmem:[%s741 + $0x8] sm:$0xff]
        %v1475 = vld [vmem:[%s741 + $0x10] sm:$0xff]
        %v1476 = vld [vmem:[%s741 + $0x18] sm:$0xff]
        %v1477 = vld [vmem:[%s741 + $0x20] sm:$0xff]
        %v1478 = vld [vmem:[%s741 + $0x28] sm:$0xff]
        %v1479 = vld [vmem:[%s741 + $0x30] sm:$0xff]
        %v1480 = vld [vmem:[%s741 + $0x38] sm:$0xff]
        %1481 = vset.pattern.permute.xlu0 0
        %1482 = vperm.xlu0 %1481, %v1473
        %v1483 = vpop.permute.xlu0 %1482
        %1484 = vset.pattern.permute.xlu0 0
        %1485 = vperm.xlu0 %1484, %v1474
        %v1486 = vpop.permute.xlu0 %1485
        %1487 = vset.pattern.permute.xlu0 0
        %1488 = vperm.xlu0 %1487, %v1475
        %v1489 = vpop.permute.xlu0 %1488
        %1490 = vset.pattern.permute.xlu0 0
        %1491 = vperm.xlu0 %1490, %v1476
        %v1492 = vpop.permute.xlu0 %1491
        %1493 = vset.pattern.permute.xlu0 0
        %1494 = vperm.xlu0 %1493, %v1477
        %v1495 = vpop.permute.xlu0 %1494
        %1496 = vset.pattern.permute.xlu0 0
        %1497 = vperm.xlu0 %1496, %v1478
        %v1498 = vpop.permute.xlu0 %1497
        %1499 = vset.pattern.permute.xlu0 0
        %1500 = vperm.xlu0 %1499, %v1479
        %v1501 = vpop.permute.xlu0 %1500
        %1502 = vset.pattern.permute.xlu0 0
        %1503 = vperm.xlu0 %1502, %v1480
        %v1504 = vpop.permute.xlu0 %1503
        %vm1505 = vcmp.eq.s32.totalorder %v1460, %v1483
        %vm1506 = vcmp.eq.s32.totalorder %v1460, %v1486
        %vm1507 = vcmp.eq.s32.totalorder %v1460, %v1489
        %vm1508 = vcmp.eq.s32.totalorder %v1460, %v1492
        %vm1509 = vcmp.eq.s32.totalorder %v1460, %v1495
        %vm1510 = vcmp.eq.s32.totalorder %v1460, %v1498
        %vm1511 = vcmp.eq.s32.totalorder %v1460, %v1501
        %vm1512 = vcmp.eq.s32.totalorder %v1460, %v1504
        %v1513 = vsel %vm1505, 1, 0
        %v1514 = vsel %vm1506, 1, 0
        %v1515 = vsel %vm1507, 1, 0
        %v1516 = vsel %vm1508, 1, 0
        %v1517 = vsel %vm1509, 1, 0
        %v1518 = vsel %vm1510, 1, 0
        %v1519 = vsel %vm1511, 1, 0
        %v1520 = vsel %vm1512, 1, 0
        %v1521 = vcvt.s32.f32 %v1513
        %v1522 = vcvt.s32.f32 %v1514
        %v1523 = vcvt.s32.f32 %v1515
        %v1524 = vcvt.s32.f32 %v1516
        %v1525 = vcvt.s32.f32 %v1517
        %v1526 = vcvt.s32.f32 %v1518
        %v1527 = vcvt.s32.f32 %v1519
        %v1528 = vcvt.s32.f32 %v1520
        %vm1529 = vcmask 31744
        %v1531 = vsel %vm1529, %v1521, 0
        %v1534 = vsel %vm1529, %v1522, 0
        %v1537 = vsel %vm1529, %v1523, 0
        %v1540 = vsel %vm1529, %v1524, 0
        %v1543 = vsel %vm1529, %v1525, 0
        %v1546 = vsel %vm1529, %v1526, 0
        %v1549 = vsel %vm1529, %v1527, 0
        %v1552 = vsel %vm1529, %v1528, 0
        %vm1554 = vcmask 1043456
        %v1556 = vsel %vm1554, %v1463, 0
        %1558 = vmatprep.subr.mxu0 0.0
        %1559 = vmatpush1.msra.mxu0 %v1556
        %1560 = vmatprep.subr.mxu0 0.0
        %1561 = vmatpush1.msra.mxu0 0.0
        %1562 = vmatprep.subr.mxu0 0.0
        %1563 = vmatpush1.msra.mxu0 0.0
        %1564 = vmatprep.subr.mxu0 0.0
        %1565 = vmatpush1.msra.mxu0 0.0
        %1566 = vmatprep.subr.mxu0 0.0
        %1567 = vmatpush1.msra.mxu0 0.0
        %1568 = vmatprep.subr.mxu0 0.0
        %1569 = vmatpush1.msra.mxu0 0.0
        %1570 = vmatprep.subr.mxu0 0.0
        %1571 = vmatpush1.msra.mxu0 0.0
        %1572 = vmatprep.subr.mxu0 0.0
        %1573 = vmatpush1.msra.mxu0 0.0
        %1574 = vmatprep.subr.mxu0 0.0
        %1575 = vmatpush1.msra.mxu0 0.0
        %1576 = vmatprep.subr.mxu0 0.0
        %1577 = vmatpush1.msra.mxu0 0.0
        %1578 = vmatprep.subr.mxu0 0.0
        %1579 = vmatpush1.msra.mxu0 0.0
        %1580 = vmatprep.subr.mxu0 0.0
        %1581 = vmatpush1.msra.mxu0 0.0
        %1582 = vmatprep.subr.mxu0 0.0
        %1583 = vmatpush1.msra.mxu0 0.0
        %1584 = vmatprep.subr.mxu0 0.0
        %1585 = vmatpush1.msra.mxu0 0.0
        %1586 = vmatprep.subr.mxu0 0.0
        %1587 = vmatpush1.msra.mxu0 0.0
        %1588 = vmatprep.subr.mxu0 0.0
        %1589 = vmatpush1.msra.mxu0 0.0
        %1590 = vmatprep.subr.mxu0 0.0
        %1591 = vmatpush1.msra.mxu0 0.0
        %1592 = vmatprep.subr.mxu0 0.0
        %1593 = vmatpush1.msra.mxu0 0.0
        %1594 = vmatprep.subr.mxu0 0.0
        %1595 = vmatpush1.msra.mxu0 0.0
        %1596 = vmatprep.subr.mxu0 0.0
        %1597 = vmatpush1.msra.mxu0 0.0
        %1598 = vmatprep.subr.mxu0 0.0
        %1599 = vmatpush1.msra.mxu0 0.0
        %1600 = vmatprep.subr.mxu0 0.0
        %1601 = vmatpush1.msra.mxu0 0.0
        %1602 = vmatprep.subr.mxu0 0.0
        %1603 = vmatpush1.msra.mxu0 0.0
        %1604 = vmatprep.subr.mxu0 0.0
        %1605 = vmatpush1.msra.mxu0 0.0
        %1606 = vmatprep.subr.mxu0 0.0
        %1607 = vmatpush1.msra.mxu0 0.0
        %1608 = vmatprep.subr.mxu0 0.0
        %1609 = vmatpush1.msra.mxu0 0.0
        %1610 = vmatprep.subr.mxu0 0.0
        %1611 = vmatpush1.msra.mxu0 0.0
        %1612 = vmatprep.subr.mxu0 0.0
        %1613 = vmatpush1.msra.mxu0 0.0
        %1614 = vmatprep.subr.mxu0 0.0
        %1615 = vmatpush1.msra.mxu0 0.0
        %1616 = vmatprep.subr.mxu0 0.0
        %1617 = vmatpush1.msra.mxu0 0.0
        %1618 = vmatprep.subr.mxu0 0.0
        %1619 = vmatpush1.msra.mxu0 0.0
        %1620 = vmatprep.subr.mxu0 0.0
        %1621 = vmatpush1.msra.mxu0 0.0
        %1622 = vmatprep.mubr.f32.mxu0 0.0
        %1623 = vmatmul.mubr.f32.gmra.mrb[0].mxu0 %v1531
        %v1624 = vpop.f32.mrb[0].mxu0
        %v1625 = vadd.f32 0.0, %v1624
        %v1626 = vpop.f32.mrb[0].mxu0
        %1627 = vmatprep.mubr.f32.mxu0 0.0
        %1628 = vmatmul.mubr.f32.gmra.mrb[0].mxu0 %v1534
        %v1629 = vpop.f32.mrb[0].mxu0
        %v1630 = vadd.f32 0.0, %v1629
        %v1631 = vpop.f32.mrb[0].mxu0
        %1632 = vmatprep.mubr.f32.mxu0 0.0
        %1633 = vmatmul.mubr.f32.gmra.mrb[0].mxu0 %v1537
        %v1634 = vpop.f32.mrb[0].mxu0
        %v1635 = vadd.f32 0.0, %v1634
        %v1636 = vpop.f32.mrb[0].mxu0
        %1637 = vmatprep.mubr.f32.mxu0 0.0
        %1638 = vmatmul.mubr.f32.gmra.mrb[0].mxu0 %v1540
        %v1639 = vpop.f32.mrb[0].mxu0
        %v1640 = vadd.f32 0.0, %v1639
        %v1641 = vpop.f32.mrb[0].mxu0
        %1642 = vmatprep.mubr.f32.mxu0 0.0
        %1643 = vmatmul.mubr.f32.gmra.mrb[0].mxu0 %v1543
        %v1644 = vpop.f32.mrb[0].mxu0
        %v1645 = vadd.f32 0.0, %v1644
        %v1646 = vpop.f32.mrb[0].mxu0
        %1647 = vmatprep.mubr.f32.mxu0 0.0
        %1648 = vmatmul.mubr.f32.gmra.mrb[0].mxu0 %v1546
        %v1649 = vpop.f32.mrb[0].mxu0
        %v1650 = vadd.f32 0.0, %v1649
        %v1651 = vpop.f32.mrb[0].mxu0
        %1652 = vmatprep.mubr.f32.mxu0 0.0
        %1653 = vmatmul.mubr.f32.gmra.mrb[0].mxu0 %v1549
        %v1654 = vpop.f32.mrb[0].mxu0
        %v1655 = vadd.f32 0.0, %v1654
        %v1656 = vpop.f32.mrb[0].mxu0
        %1657 = vmatprep.mubr.f32.mxu0 0.0
        %1658 = vmatmul.mubr.f32.gmra.mrb[0].mxu0 %v1552
        %v1659 = vpop.f32.mrb[0].mxu0
        %v1660 = vadd.f32 0.0, %v1659
        %v1661 = vpop.f32.mrb[0].mxu0
        %1662 = vdwg.mxu0
        %v1663 = vld [vmem:[%s727] sm:$0xff]
        %v1664 = vld [vmem:[%s727 + $0x8] sm:$0xff]
        %v1665 = vld [vmem:[%s727 + $0x10] sm:$0xff]
        %v1666 = vld [vmem:[%s727 + $0x18] sm:$0xff]
        %v1667 = vld [vmem:[%s727 + $0x20] sm:$0xff]
        %v1668 = vld [vmem:[%s727 + $0x28] sm:$0xff]
        %v1669 = vld [vmem:[%s727 + $0x30] sm:$0xff]
        %v1670 = vld [vmem:[%s727 + $0x38] sm:$0xff]
        %v1671 = vld [vmem:[%s732] sm:$0xff]
        %v1672 = vld [vmem:[%s732 + $0x8] sm:$0xff]
        %v1673 = vld [vmem:[%s732 + $0x10] sm:$0xff]
        %v1674 = vld [vmem:[%s732 + $0x18] sm:$0xff]
        %v1675 = vld [vmem:[%s732 + $0x20] sm:$0xff]
        %v1676 = vld [vmem:[%s732 + $0x28] sm:$0xff]
        %v1677 = vld [vmem:[%s732 + $0x30] sm:$0xff]
        %v1678 = vld [vmem:[%s732 + $0x38] sm:$0xff]
        %v1679 = vstv %s747
        %v1680 = vmul.f32 %v1679, %v1663
        %v1681 = vmul.f32 %v1679, %v1664
        %v1682 = vmul.f32 %v1679, %v1665
        %v1683 = vmul.f32 %v1679, %v1666
        %v1684 = vmul.f32 %v1679, %v1667
        %v1685 = vmul.f32 %v1679, %v1668
        %v1686 = vmul.f32 %v1679, %v1669
        %v1687 = vmul.f32 %v1679, %v1670
        %v1688 = vstv %s749
        %v1689 = vmul.f32 %v1688, %v1671
        %v1690 = vmul.f32 %v1688, %v1672
        %v1691 = vmul.f32 %v1688, %v1673
        %v1692 = vmul.f32 %v1688, %v1674
        %v1693 = vmul.f32 %v1688, %v1675
        %v1694 = vmul.f32 %v1688, %v1676
        %v1695 = vmul.f32 %v1688, %v1677
        %v1696 = vmul.f32 %v1688, %v1678
        %v1697 = vadd.f32 %v1680, %v1689
        %v1698 = vadd.f32 %v1681, %v1690
        %v1699 = vadd.f32 %v1682, %v1691
        %v1700 = vadd.f32 %v1683, %v1692
        %v1701 = vadd.f32 %v1684, %v1693
        %v1702 = vadd.f32 %v1685, %v1694
        %v1703 = vadd.f32 %v1686, %v1695
        %v1704 = vadd.f32 %v1687, %v1696
        %v1705 = vld [vmem:[%s16] sm:$0xff]
        %v1706 = vld [vmem:[%s16 + $0x8] sm:$0xff]
        %v1707 = vld [vmem:[%s16 + $0x10] sm:$0xff]
        %v1708 = vld [vmem:[%s16 + $0x18] sm:$0xff]
        %v1709 = vld [vmem:[%s17] sm:$0x1]
        %v1710 = vstv %s751
        %v1711 = vmul.f32 %v1710, %v1709
        %1713 = vrot.lane.b32.xlu0 %v1472, 93
        %v1714 = vpop.permute.xlu0 %1713
        %v1715 = vsel %vm921, %v1714, 0
        %1717 = vmatprep.subr.mxu0 0.0
        %1718 = vmatpush1.msra.mxu0 %v1705
        %1719 = vmatprep.subr.mxu0 0.0
        %1720 = vmatpush1.msra.mxu0 %v1706
        %1721 = vmatprep.subr.mxu0 0.0
        %1722 = vmatpush1.msra.mxu0 %v1707
        %1723 = vmatprep.subr.mxu0 0.0
        %1724 = vmatpush1.msra.mxu0 %v1708
        %1725 = vmatprep.subr.mxu0 0.0
        %1726 = vmatpush1.msra.mxu0 0.0
        %1727 = vmatprep.subr.mxu0 0.0
        %1728 = vmatpush1.msra.mxu0 0.0
        %1729 = vmatprep.subr.mxu0 0.0
        %1730 = vmatpush1.msra.mxu0 0.0
        %1731 = vmatprep.subr.mxu0 0.0
        %1732 = vmatpush1.msra.mxu0 0.0
        %1733 = vmatprep.subr.mxu0 0.0
        %1734 = vmatpush1.msra.mxu0 0.0
        %1735 = vmatprep.subr.mxu0 0.0
        %1736 = vmatpush1.msra.mxu0 0.0
        %1737 = vmatprep.subr.mxu0 0.0
        %1738 = vmatpush1.msra.mxu0 0.0
        %1739 = vmatprep.subr.mxu0 0.0
        %1740 = vmatpush1.msra.mxu0 0.0
        %1741 = vmatprep.subr.mxu0 0.0
        %1742 = vmatpush1.msra.mxu0 0.0
        %1743 = vmatprep.subr.mxu0 0.0
        %1744 = vmatpush1.msra.mxu0 0.0
        %1745 = vmatprep.subr.mxu0 0.0
        %1746 = vmatpush1.msra.mxu0 0.0
        %1747 = vmatprep.subr.mxu0 0.0
        %1748 = vmatpush1.msra.mxu0 0.0
        %1749 = vmatprep.subr.mxu0 0.0
        %1750 = vmatpush1.msra.mxu0 0.0
        %1751 = vmatprep.subr.mxu0 0.0
        %1752 = vmatpush1.msra.mxu0 0.0
        %1753 = vmatprep.subr.mxu0 0.0
        %1754 = vmatpush1.msra.mxu0 0.0
        %1755 = vmatprep.subr.mxu0 0.0
        %1756 = vmatpush1.msra.mxu0 0.0
        %1757 = vmatprep.subr.mxu0 0.0
        %1758 = vmatpush1.msra.mxu0 0.0
        %1759 = vmatprep.subr.mxu0 0.0
        %1760 = vmatpush1.msra.mxu0 0.0
        %1761 = vmatprep.subr.mxu0 0.0
        %1762 = vmatpush1.msra.mxu0 0.0
        %1763 = vmatprep.subr.mxu0 0.0
        %1764 = vmatpush1.msra.mxu0 0.0
        %1765 = vmatprep.subr.mxu0 0.0
        %1766 = vmatpush1.msra.mxu0 0.0
        %1767 = vmatprep.subr.mxu0 0.0
        %1768 = vmatpush1.msra.mxu0 0.0
        %1769 = vmatprep.subr.mxu0 0.0
        %1770 = vmatpush1.msra.mxu0 0.0
        %1771 = vmatprep.subr.mxu0 0.0
        %1772 = vmatpush1.msra.mxu0 0.0
        %1773 = vmatprep.subr.mxu0 0.0
        %1774 = vmatpush1.msra.mxu0 0.0
        %1775 = vmatprep.subr.mxu0 0.0
        %1776 = vmatpush1.msra.mxu0 0.0
        %1777 = vmatprep.subr.mxu0 0.0
        %1778 = vmatpush1.msra.mxu0 0.0
        %1779 = vmatprep.subr.mxu0 0.0
        %1780 = vmatpush1.msra.mxu0 0.0
        %1781 = vmatprep.mubr.f32.mxu0 0.0
        %1782 = vmatmul.mubr.f32.gmra.mrb[0].mxu0 %v1715
        %v1783 = vpop.f32.mrb[0].mxu0
        %v1784 = vadd.f32 %v1711, %v1783
        %v1785 = vpop.f32.mrb[0].mxu0
        %1786 = vdwg.mxu0
        %v1787 = vld [vmem:[%s18] sm:$0x1]
        %v1788 = vadd.f32 %v1784, %v1787
        %v1789 = vld [vmem:[%s14] sm:$0x7]
        %v1790 = vld [vmem:[%s15] sm:$0xff]
        %v1791 = vld [vmem:[%s15 + $0x8] sm:$0xff]
        %v1792 = vld [vmem:[%s15 + $0x10] sm:$0xff]
        %v1793 = vld [vmem:[%s15 + $0x18] sm:$0xff]
        %v1794 = vld [vmem:[%s15 + $0x20] sm:$0x7]
        %vm1795 = vcmask 285696
        %v1797 = vsel %vm1795, %v1625, 0
        %v1800 = vsel %vm1795, %v1630, 0
        %v1803 = vsel %vm1795, %v1635, 0
        %v1806 = vsel %vm1795, %v1640, 0
        %v1809 = vsel %vm1795, %v1645, 0
        %v1812 = vsel %vm1795, %v1650, 0
        %v1815 = vsel %vm1795, %v1655, 0
        %v1818 = vsel %vm1795, %v1660, 0
        %vm1820 = vcmask 1042432
        %v1822 = vsel %vm1820, %v1794, 0
        %1824 = vmatprep.subr.mxu0 0.0
        %1825 = vmatpush1.msra.mxu0 %v1790
        %1826 = vmatprep.subr.mxu0 0.0
        %1827 = vmatpush1.msra.mxu0 %v1791
        %1828 = vmatprep.subr.mxu0 0.0
        %1829 = vmatpush1.msra.mxu0 %v1792
        %1830 = vmatprep.subr.mxu0 0.0
        %1831 = vmatpush1.msra.mxu0 %v1793
        %1832 = vmatprep.subr.mxu0 0.0
        %1833 = vmatpush1.msra.mxu0 %v1822
        %1834 = vmatprep.subr.mxu0 0.0
        %1835 = vmatpush1.msra.mxu0 0.0
        %1836 = vmatprep.subr.mxu0 0.0
        %1837 = vmatpush1.msra.mxu0 0.0
        %1838 = vmatprep.subr.mxu0 0.0
        %1839 = vmatpush1.msra.mxu0 0.0
        %1840 = vmatprep.subr.mxu0 0.0
        %1841 = vmatpush1.msra.mxu0 0.0
        %1842 = vmatprep.subr.mxu0 0.0
        %1843 = vmatpush1.msra.mxu0 0.0
        %1844 = vmatprep.subr.mxu0 0.0
        %1845 = vmatpush1.msra.mxu0 0.0
        %1846 = vmatprep.subr.mxu0 0.0
        %1847 = vmatpush1.msra.mxu0 0.0
        %1848 = vmatprep.subr.mxu0 0.0
        %1849 = vmatpush1.msra.mxu0 0.0
        %1850 = vmatprep.subr.mxu0 0.0
        %1851 = vmatpush1.msra.mxu0 0.0
        %1852 = vmatprep.subr.mxu0 0.0
        %1853 = vmatpush1.msra.mxu0 0.0
        %1854 = vmatprep.subr.mxu0 0.0
        %1855 = vmatpush1.msra.mxu0 0.0
        %1856 = vmatprep.subr.mxu0 0.0
        %1857 = vmatpush1.msra.mxu0 0.0
        %1858 = vmatprep.subr.mxu0 0.0
        %1859 = vmatpush1.msra.mxu0 0.0
        %1860 = vmatprep.subr.mxu0 0.0
        %1861 = vmatpush1.msra.mxu0 0.0
        %1862 = vmatprep.subr.mxu0 0.0
        %1863 = vmatpush1.msra.mxu0 0.0
        %1864 = vmatprep.subr.mxu0 0.0
        %1865 = vmatpush1.msra.mxu0 0.0
        %1866 = vmatprep.subr.mxu0 0.0
        %1867 = vmatpush1.msra.mxu0 0.0
        %1868 = vmatprep.subr.mxu0 0.0
        %1869 = vmatpush1.msra.mxu0 0.0
        %1870 = vmatprep.subr.mxu0 0.0
        %1871 = vmatpush1.msra.mxu0 0.0
        %1872 = vmatprep.subr.mxu0 0.0
        %1873 = vmatpush1.msra.mxu0 0.0
        %1874 = vmatprep.subr.mxu0 0.0
        %1875 = vmatpush1.msra.mxu0 0.0
        %1876 = vmatprep.subr.mxu0 0.0
        %1877 = vmatpush1.msra.mxu0 0.0
        %1878 = vmatprep.subr.mxu0 0.0
        %1879 = vmatpush1.msra.mxu0 0.0
        %1880 = vmatprep.subr.mxu0 0.0
        %1881 = vmatpush1.msra.mxu0 0.0
        %1882 = vmatprep.subr.mxu0 0.0
        %1883 = vmatpush1.msra.mxu0 0.0
        %1884 = vmatprep.subr.mxu0 0.0
        %1885 = vmatpush1.msra.mxu0 0.0
        %1886 = vmatprep.subr.mxu0 0.0
        %1887 = vmatpush1.msra.mxu0 0.0
        %1888 = vmatprep.mubr.f32.mxu0 0.0
        %1889 = vmatmul.mubr.f32.gmra.mrb[0].mxu0 %v1797
        %v1890 = vpop.f32.mrb[0].mxu0
        %v1891 = vadd.f32 0.0, %v1890
        %v1892 = vpop.f32.mrb[0].mxu0
        %1893 = vmatprep.mubr.f32.mxu0 0.0
        %1894 = vmatmul.mubr.f32.gmra.mrb[0].mxu0 %v1800
        %v1895 = vpop.f32.mrb[0].mxu0
        %v1896 = vadd.f32 0.0, %v1895
        %v1897 = vpop.f32.mrb[0].mxu0
        %1898 = vmatprep.mubr.f32.mxu0 0.0
        %1899 = vmatmul.mubr.f32.gmra.mrb[0].mxu0 %v1803
        %v1900 = vpop.f32.mrb[0].mxu0
        %v1901 = vadd.f32 0.0, %v1900
        %v1902 = vpop.f32.mrb[0].mxu0
        %1903 = vmatprep.mubr.f32.mxu0 0.0
        %1904 = vmatmul.mubr.f32.gmra.mrb[0].mxu0 %v1806
        %v1905 = vpop.f32.mrb[0].mxu0
        %v1906 = vadd.f32 0.0, %v1905
        %v1907 = vpop.f32.mrb[0].mxu0
        %1908 = vmatprep.mubr.f32.mxu0 0.0
        %1909 = vmatmul.mubr.f32.gmra.mrb[0].mxu0 %v1809
        %v1910 = vpop.f32.mrb[0].mxu0
        %v1911 = vadd.f32 0.0, %v1910
        %v1912 = vpop.f32.mrb[0].mxu0
        %1913 = vmatprep.mubr.f32.mxu0 0.0
        %1914 = vmatmul.mubr.f32.gmra.mrb[0].mxu0 %v1812
        %v1915 = vpop.f32.mrb[0].mxu0
        %v1916 = vadd.f32 0.0, %v1915
        %v1917 = vpop.f32.mrb[0].mxu0
        %1918 = vmatprep.mubr.f32.mxu0 0.0
        %1919 = vmatmul.mubr.f32.gmra.mrb[0].mxu0 %v1815
        %v1920 = vpop.f32.mrb[0].mxu0
        %v1921 = vadd.f32 0.0, %v1920
        %v1922 = vpop.f32.mrb[0].mxu0
        %1923 = vmatprep.mubr.f32.mxu0 0.0
        %1924 = vmatmul.mubr.f32.gmra.mrb[0].mxu0 %v1818
        %v1925 = vpop.f32.mrb[0].mxu0
        %v1926 = vadd.f32 0.0, %v1925
        %v1927 = vpop.f32.mrb[0].mxu0
        %1928 = vdwg.mxu0
        %vm1929 = vcmask 23552
        %v1931 = vsel %vm1929, %v1697, 0
        %v1934 = vsel %vm1929, %v1698, 0
        %v1937 = vsel %vm1929, %v1699, 0
        %v1940 = vsel %vm1929, %v1700, 0
        %v1943 = vsel %vm1929, %v1701, 0
        %v1946 = vsel %vm1929, %v1702, 0
        %v1949 = vsel %vm1929, %v1703, 0
        %v1952 = vsel %vm1929, %v1704, 0
        %v1955 = vsel %vm1820, %v1789, 0
        %1957 = vmatprep.subr.mxu0 0.0
        %1958 = vmatpush1.msra.mxu0 %v1955
        %1959 = vmatprep.subr.mxu0 0.0
        %1960 = vmatpush1.msra.mxu0 0.0
        %1961 = vmatprep.subr.mxu0 0.0
        %1962 = vmatpush1.msra.mxu0 0.0
        %1963 = vmatprep.subr.mxu0 0.0
        %1964 = vmatpush1.msra.mxu0 0.0
        %1965 = vmatprep.subr.mxu0 0.0
        %1966 = vmatpush1.msra.mxu0 0.0
        %1967 = vmatprep.subr.mxu0 0.0
        %1968 = vmatpush1.msra.mxu0 0.0
        %1969 = vmatprep.subr.mxu0 0.0
        %1970 = vmatpush1.msra.mxu0 0.0
        %1971 = vmatprep.subr.mxu0 0.0
        %1972 = vmatpush1.msra.mxu0 0.0
        %1973 = vmatprep.subr.mxu0 0.0
        %1974 = vmatpush1.msra.mxu0 0.0
        %1975 = vmatprep.subr.mxu0 0.0
        %1976 = vmatpush1.msra.mxu0 0.0
        %1977 = vmatprep.subr.mxu0 0.0
        %1978 = vmatpush1.msra.mxu0 0.0
        %1979 = vmatprep.subr.mxu0 0.0
        %1980 = vmatpush1.msra.mxu0 0.0
        %1981 = vmatprep.subr.mxu0 0.0
        %1982 = vmatpush1.msra.mxu0 0.0
        %1983 = vmatprep.subr.mxu0 0.0
        %1984 = vmatpush1.msra.mxu0 0.0
        %1985 = vmatprep.subr.mxu0 0.0
        %1986 = vmatpush1.msra.mxu0 0.0
        %1987 = vmatprep.subr.mxu0 0.0
        %1988 = vmatpush1.msra.mxu0 0.0
        %1989 = vmatprep.subr.mxu0 0.0
        %1990 = vmatpush1.msra.mxu0 0.0
        %1991 = vmatprep.subr.mxu0 0.0
        %1992 = vmatpush1.msra.mxu0 0.0
        %1993 = vmatprep.subr.mxu0 0.0
        %1994 = vmatpush1.msra.mxu0 0.0
        %1995 = vmatprep.subr.mxu0 0.0
        %1996 = vmatpush1.msra.mxu0 0.0
        %1997 = vmatprep.subr.mxu0 0.0
        %1998 = vmatpush1.msra.mxu0 0.0
        %1999 = vmatprep.subr.mxu0 0.0
        %2000 = vmatpush1.msra.mxu0 0.0
        %2001 = vmatprep.subr.mxu0 0.0
        %2002 = vmatpush1.msra.mxu0 0.0
        %2003 = vmatprep.subr.mxu0 0.0
        %2004 = vmatpush1.msra.mxu0 0.0
        %2005 = vmatprep.subr.mxu0 0.0
        %2006 = vmatpush1.msra.mxu0 0.0
        %2007 = vmatprep.subr.mxu0 0.0
        %2008 = vmatpush1.msra.mxu0 0.0
        %2009 = vmatprep.subr.mxu0 0.0
        %2010 = vmatpush1.msra.mxu0 0.0
        %2011 = vmatprep.subr.mxu0 0.0
        %2012 = vmatpush1.msra.mxu0 0.0
        %2013 = vmatprep.subr.mxu0 0.0
        %2014 = vmatpush1.msra.mxu0 0.0
        %2015 = vmatprep.subr.mxu0 0.0
        %2016 = vmatpush1.msra.mxu0 0.0
        %2017 = vmatprep.subr.mxu0 0.0
        %2018 = vmatpush1.msra.mxu0 0.0
        %2019 = vmatprep.subr.mxu0 0.0
        %2020 = vmatpush1.msra.mxu0 0.0
        %2021 = vmatprep.mubr.f32.mxu0 0.0
        %2022 = vmatmul.mubr.f32.gmra.mrb[0].mxu0 %v1931
        %v2023 = vpop.f32.mrb[0].mxu0
        %v2024 = vadd.f32 %v1891, %v2023
        %v2025 = vpop.f32.mrb[0].mxu0
        %2026 = vmatprep.mubr.f32.mxu0 0.0
        %2027 = vmatmul.mubr.f32.gmra.mrb[0].mxu0 %v1934
        %v2028 = vpop.f32.mrb[0].mxu0
        %v2029 = vadd.f32 %v1896, %v2028
        %v2030 = vpop.f32.mrb[0].mxu0
        %2031 = vmatprep.mubr.f32.mxu0 0.0
        %2032 = vmatmul.mubr.f32.gmra.mrb[0].mxu0 %v1937
        %v2033 = vpop.f32.mrb[0].mxu0
        %v2034 = vadd.f32 %v1901, %v2033
        %v2035 = vpop.f32.mrb[0].mxu0
        %2036 = vmatprep.mubr.f32.mxu0 0.0
        %2037 = vmatmul.mubr.f32.gmra.mrb[0].mxu0 %v1940
        %v2038 = vpop.f32.mrb[0].mxu0
        %v2039 = vadd.f32 %v1906, %v2038
        %v2040 = vpop.f32.mrb[0].mxu0
        %2041 = vmatprep.mubr.f32.mxu0 0.0
        %2042 = vmatmul.mubr.f32.gmra.mrb[0].mxu0 %v1943
        %v2043 = vpop.f32.mrb[0].mxu0
        %v2044 = vadd.f32 %v1911, %v2043
        %v2045 = vpop.f32.mrb[0].mxu0
        %2046 = vmatprep.mubr.f32.mxu0 0.0
        %2047 = vmatmul.mubr.f32.gmra.mrb[0].mxu0 %v1946
        %v2048 = vpop.f32.mrb[0].mxu0
        %v2049 = vadd.f32 %v1916, %v2048
        %v2050 = vpop.f32.mrb[0].mxu0
        %2051 = vmatprep.mubr.f32.mxu0 0.0
        %2052 = vmatmul.mubr.f32.gmra.mrb[0].mxu0 %v1949
        %v2053 = vpop.f32.mrb[0].mxu0
        %v2054 = vadd.f32 %v1921, %v2053
        %v2055 = vpop.f32.mrb[0].mxu0
        %2056 = vmatprep.mubr.f32.mxu0 0.0
        %2057 = vmatmul.mubr.f32.gmra.mrb[0].mxu0 %v1952
        %v2058 = vpop.f32.mrb[0].mxu0
        %v2059 = vadd.f32 %v1926, %v2058
        %v2060 = vpop.f32.mrb[0].mxu0
        %2061 = vdwg.mxu0
        %v2062 = vlaneseq
        %v2063 = vshrl.u32 %v2062, 7
        %v2064 = vsub.s32 0, %v2063
        %v2065 = vrot.slane %v1788, %v2064
        %v2066 = vadd.f32 %v2024, %v2065
        %v2067 = vadd.f32 %v2029, %v2065
        %v2068 = vadd.f32 %v2034, %v2065
        %v2069 = vadd.f32 %v2039, %v2065
        %v2070 = vadd.f32 %v2044, %v2065
        %v2071 = vadd.f32 %v2049, %v2065
        %v2072 = vadd.f32 %v2054, %v2065
        %v2073 = vadd.f32 %v2059, %v2065
        %v2074 = vmax.f32 %v2066, 0.0
        %v2075 = vmax.f32 %v2067, 0.0
        %v2076 = vmax.f32 %v2068, 0.0
        %v2077 = vmax.f32 %v2069, 0.0
        %v2078 = vmax.f32 %v2070, 0.0
        %v2079 = vmax.f32 %v2071, 0.0
        %v2080 = vmax.f32 %v2072, 0.0
        %v2081 = vmax.f32 %v2073, 0.0
        %v2082 = vld [vmem:[%s19] sm:$0xff]
        %v2083 = vld [vmem:[%s19 + $0x8] sm:$0xff]
        %v2084 = vld [vmem:[%s19 + $0x10] sm:$0xff]
        %v2085 = vld [vmem:[%s19 + $0x18] sm:$0xff]
        %v2086 = vld [vmem:[%s20] sm:$0x1]
        %v2088 = vlaneseq
        %v2089 = vshrl.u32 %v2088, 7
        %v2090 = vsub.s32 0, %v2089
        %v2091 = vrot.slane %v2086, %v2090
        %v2094 = vsel %vm921, %v2074, 0
        %v2097 = vsel %vm921, %v2075, 0
        %v2100 = vsel %vm921, %v2076, 0
        %v2103 = vsel %vm921, %v2077, 0
        %v2106 = vsel %vm921, %v2078, 0
        %v2109 = vsel %vm921, %v2079, 0
        %v2112 = vsel %vm921, %v2080, 0
        %v2115 = vsel %vm921, %v2081, 0
        %2117 = vmatprep.subr.mxu0 0.0
        %2118 = vmatpush1.msra.mxu0 %v2082
        %2119 = vmatprep.subr.mxu0 0.0
        %2120 = vmatpush1.msra.mxu0 %v2083
        %2121 = vmatprep.subr.mxu0 0.0
        %2122 = vmatpush1.msra.mxu0 %v2084
        %2123 = vmatprep.subr.mxu0 0.0
        %2124 = vmatpush1.msra.mxu0 %v2085
        %2125 = vmatprep.subr.mxu0 0.0
        %2126 = vmatpush1.msra.mxu0 0.0
        %2127 = vmatprep.subr.mxu0 0.0
        %2128 = vmatpush1.msra.mxu0 0.0
        %2129 = vmatprep.subr.mxu0 0.0
        %2130 = vmatpush1.msra.mxu0 0.0
        %2131 = vmatprep.subr.mxu0 0.0
        %2132 = vmatpush1.msra.mxu0 0.0
        %2133 = vmatprep.subr.mxu0 0.0
        %2134 = vmatpush1.msra.mxu0 0.0
        %2135 = vmatprep.subr.mxu0 0.0
        %2136 = vmatpush1.msra.mxu0 0.0
        %2137 = vmatprep.subr.mxu0 0.0
        %2138 = vmatpush1.msra.mxu0 0.0
        %2139 = vmatprep.subr.mxu0 0.0
        %2140 = vmatpush1.msra.mxu0 0.0
        %2141 = vmatprep.subr.mxu0 0.0
        %2142 = vmatpush1.msra.mxu0 0.0
        %2143 = vmatprep.subr.mxu0 0.0
        %2144 = vmatpush1.msra.mxu0 0.0
        %2145 = vmatprep.subr.mxu0 0.0
        %2146 = vmatpush1.msra.mxu0 0.0
        %2147 = vmatprep.subr.mxu0 0.0
        %2148 = vmatpush1.msra.mxu0 0.0
        %2149 = vmatprep.subr.mxu0 0.0
        %2150 = vmatpush1.msra.mxu0 0.0
        %2151 = vmatprep.subr.mxu0 0.0
        %2152 = vmatpush1.msra.mxu0 0.0
        %2153 = vmatprep.subr.mxu0 0.0
        %2154 = vmatpush1.msra.mxu0 0.0
        %2155 = vmatprep.subr.mxu0 0.0
        %2156 = vmatpush1.msra.mxu0 0.0
        %2157 = vmatprep.subr.mxu0 0.0
        %2158 = vmatpush1.msra.mxu0 0.0
        %2159 = vmatprep.subr.mxu0 0.0
        %2160 = vmatpush1.msra.mxu0 0.0
        %2161 = vmatprep.subr.mxu0 0.0
        %2162 = vmatpush1.msra.mxu0 0.0
        %2163 = vmatprep.subr.mxu0 0.0
        %2164 = vmatpush1.msra.mxu0 0.0
        %2165 = vmatprep.subr.mxu0 0.0
        %2166 = vmatpush1.msra.mxu0 0.0
        %2167 = vmatprep.subr.mxu0 0.0
        %2168 = vmatpush1.msra.mxu0 0.0
        %2169 = vmatprep.subr.mxu0 0.0
        %2170 = vmatpush1.msra.mxu0 0.0
        %2171 = vmatprep.subr.mxu0 0.0
        %2172 = vmatpush1.msra.mxu0 0.0
        %2173 = vmatprep.subr.mxu0 0.0
        %2174 = vmatpush1.msra.mxu0 0.0
        %2175 = vmatprep.subr.mxu0 0.0
        %2176 = vmatpush1.msra.mxu0 0.0
        %2177 = vmatprep.subr.mxu0 0.0
        %2178 = vmatpush1.msra.mxu0 0.0
        %2179 = vmatprep.subr.mxu0 0.0
        %2180 = vmatpush1.msra.mxu0 0.0
        %2181 = vmatprep.mubr.f32.mxu0 0.0
        %2182 = vmatmul.mubr.f32.gmra.mrb[0].mxu0 %v2094
        %v2183 = vpop.f32.mrb[0].mxu0
        %v2184 = vadd.f32 %v2091, %v2183
        %v2185 = vpop.f32.mrb[0].mxu0
        %2186 = vmatprep.mubr.f32.mxu0 0.0
        %2187 = vmatmul.mubr.f32.gmra.mrb[0].mxu0 %v2097
        %v2188 = vpop.f32.mrb[0].mxu0
        %v2189 = vadd.f32 %v2091, %v2188
        %v2190 = vpop.f32.mrb[0].mxu0
        %2191 = vmatprep.mubr.f32.mxu0 0.0
        %2192 = vmatmul.mubr.f32.gmra.mrb[0].mxu0 %v2100
        %v2193 = vpop.f32.mrb[0].mxu0
        %v2194 = vadd.f32 %v2091, %v2193
        %v2195 = vpop.f32.mrb[0].mxu0
        %2196 = vmatprep.mubr.f32.mxu0 0.0
        %2197 = vmatmul.mubr.f32.gmra.mrb[0].mxu0 %v2103
        %v2198 = vpop.f32.mrb[0].mxu0
        %v2199 = vadd.f32 %v2091, %v2198
        %v2200 = vpop.f32.mrb[0].mxu0
        %2201 = vmatprep.mubr.f32.mxu0 0.0
        %2202 = vmatmul.mubr.f32.gmra.mrb[0].mxu0 %v2106
        %v2203 = vpop.f32.mrb[0].mxu0
        %v2204 = vadd.f32 %v2091, %v2203
        %v2205 = vpop.f32.mrb[0].mxu0
        %2206 = vmatprep.mubr.f32.mxu0 0.0
        %2207 = vmatmul.mubr.f32.gmra.mrb[0].mxu0 %v2109
        %v2208 = vpop.f32.mrb[0].mxu0
        %v2209 = vadd.f32 %v2091, %v2208
        %v2210 = vpop.f32.mrb[0].mxu0
        %2211 = vmatprep.mubr.f32.mxu0 0.0
        %2212 = vmatmul.mubr.f32.gmra.mrb[0].mxu0 %v2112
        %v2213 = vpop.f32.mrb[0].mxu0
        %v2214 = vadd.f32 %v2091, %v2213
        %v2215 = vpop.f32.mrb[0].mxu0
        %2216 = vmatprep.mubr.f32.mxu0 0.0
        %2217 = vmatmul.mubr.f32.gmra.mrb[0].mxu0 %v2115
        %v2218 = vpop.f32.mrb[0].mxu0
        %v2219 = vadd.f32 %v2091, %v2218
        %v2220 = vpop.f32.mrb[0].mxu0
        %2221 = vdwg.mxu0
        %v2222 = vsub.f32 %v1625, %v1663
        %v2223 = vsub.f32 %v1630, %v1664
        %v2224 = vsub.f32 %v1635, %v1665
        %v2225 = vsub.f32 %v1640, %v1666
        %v2226 = vsub.f32 %v1645, %v1667
        %v2227 = vsub.f32 %v1650, %v1668
        %v2228 = vsub.f32 %v1655, %v1669
        %v2229 = vsub.f32 %v1660, %v1670
        %v2230 = vsub.f32 %v2184, %v1671
        %v2231 = vsub.f32 %v2189, %v1672
        %v2232 = vsub.f32 %v2194, %v1673
        %v2233 = vsub.f32 %v2199, %v1674
        %v2234 = vsub.f32 %v2204, %v1675
        %v2235 = vsub.f32 %v2209, %v1676
        %v2236 = vsub.f32 %v2214, %v1677
        %v2237 = vsub.f32 %v2219, %v1678
        %v2238 = vmul.f32 %v2222, %v2222
        %v2239 = vmul.f32 %v2223, %v2223
        %v2240 = vmul.f32 %v2224, %v2224
        %v2241 = vmul.f32 %v2225, %v2225
        %v2242 = vmul.f32 %v2226, %v2226
        %v2243 = vmul.f32 %v2227, %v2227
        %v2244 = vmul.f32 %v2228, %v2228
        %v2245 = vmul.f32 %v2229, %v2229
        %v2246 = vsel %vm1929, %v2238, 0.0
        %v2247 = vsel %vm1929, %v2239, 0.0
        %v2248 = vadd.f32 %v2246, %v2247
        %v2249 = vsel %vm1929, %v2240, 0.0
        %v2250 = vadd.f32 %v2248, %v2249
        %v2251 = vsel %vm1929, %v2241, 0.0
        %v2252 = vadd.f32 %v2250, %v2251
        %v2253 = vsel %vm1929, %v2242, 0.0
        %v2254 = vadd.f32 %v2252, %v2253
        %v2255 = vsel %vm1929, %v2243, 0.0
        %v2256 = vadd.f32 %v2254, %v2255
        %v2257 = vsel %vm1929, %v2244, 0.0
        %v2258 = vadd.f32 %v2256, %v2257
        %v2259 = vsel %vm1929, %v2245, 0.0
        %v2260 = vadd.f32 %v2258, %v2259
        %2261 = vadd.xlane.f32.xlu0 %v2260
        %v2262 = vpop.xlane.xlu0 %2261
        %v2263 = vrot.slane %v2262, 4
        %v2264 = vadd.f32 %v2262, %v2263
        %v2265 = vrot.slane %v2264, 2
        %v2266 = vadd.f32 %v2264, %v2265
        %v2267 = vrot.slane %v2266, 1
        %v2268 = vadd.f32 %v2266, %v2267
        %s2269 = vtos %v2268
        %v2270 = vmul.f32 %v2230, %v2230
        %v2271 = vmul.f32 %v2231, %v2231
        %v2272 = vmul.f32 %v2232, %v2232
        %v2273 = vmul.f32 %v2233, %v2233
        %v2274 = vmul.f32 %v2234, %v2234
        %v2275 = vmul.f32 %v2235, %v2235
        %v2276 = vmul.f32 %v2236, %v2236
        %v2277 = vmul.f32 %v2237, %v2237
        %v2278 = vsel %vm1929, %v2270, 0.0
        %v2279 = vsel %vm1929, %v2271, 0.0
        %v2280 = vadd.f32 %v2278, %v2279
        %v2281 = vsel %vm1929, %v2272, 0.0
        %v2282 = vadd.f32 %v2280, %v2281
        %v2283 = vsel %vm1929, %v2273, 0.0
        %v2284 = vadd.f32 %v2282, %v2283
        %v2285 = vsel %vm1929, %v2274, 0.0
        %v2286 = vadd.f32 %v2284, %v2285
        %v2287 = vsel %vm1929, %v2275, 0.0
        %v2288 = vadd.f32 %v2286, %v2287
        %v2289 = vsel %vm1929, %v2276, 0.0
        %v2290 = vadd.f32 %v2288, %v2289
        %v2291 = vsel %vm1929, %v2277, 0.0
        %v2292 = vadd.f32 %v2290, %v2291
        %2293 = vadd.xlane.f32.xlu0 %v2292
        %v2294 = vpop.xlane.xlu0 %2293
        %v2295 = vrot.slane %v2294, 4
        %v2296 = vadd.f32 %v2294, %v2295
        %v2297 = vrot.slane %v2296, 2
        %v2298 = vadd.f32 %v2296, %v2297
        %v2299 = vrot.slane %v2298, 1
        %v2300 = vadd.f32 %v2298, %v2299
        %s2301 = vtos %v2300
        %v2302 = vlaneseq
        %v2303 = vshrl.u32 %v2302, 7
        %vm2304 = vcmp.eq.s32.totalorder %v2303, 0
        %vm2305 = vcmp.eq.s32.totalorder %v2303, 1
        %v2306 = vstv %s2301
        %v2307 = vstv %s1374
        %v2308 = vsel %vm2305, %v2306, %v2307
        %v2309 = vstv %s2269
        %v2310 = vsel %vm2304, %v2309, %v2308
        %2311 = vst [vmem:[%s745] sm:$0x7] %v2310
        %p2312 = scmp.lt.s32.totalorder %s33, 1
        %s2313 = scalar_select %p2312, %s33, 1
        %s2314 = smul.addr %s2313, 4
        %s2315 = scalar_lea.vmem %s21, %s2314
        // Predicated region
        $region109: #{tpu_custom_call.1} parent=103 // pred_check
          %p2316 = pneg %p517
        $region110: #{tpu_custom_call.1} parent=103 // pred_check_branch
          %2318 = sbr.rel (%p2316) target = $region112
        $region111: #{tpu_custom_call.1} parent=103 // pred_region
          _
        $region112: #{tpu_custom_call.1} parent=103 // pred_fallthru
          _
      $region104: #{tpu_custom_call.1} parent=5 // pred_fallthru
        _
      %p2319 = scmp.le.s32.totalorder 2, %s28
      // Predicated region
      $region113: #{tpu_custom_call.1} parent=5 // pred_check
        %p2320 = pneg %p2319
      $region114: #{tpu_custom_call.1} parent=5 // pred_check_branch
        %2322 = sbr.rel (%p2320) target = $region116
      $region115: #{tpu_custom_call.1} parent=5 // pred_region
        %s2323 = ssub.s32 %s28, 2
        // Predicated region
        $region117: #{tpu_custom_call.1} parent=115 // pred_check
          %p2324 = pneg %p523
        $region118: #{tpu_custom_call.1} parent=115 // pred_check_branch
          %2326 = sbr.rel (%p2324) target = $region120
        $region119: #{tpu_custom_call.1} parent=115 // pred_region
          %p2327 = scmp.lt.s32.totalorder %s34, 1
          %s2328 = scalar_select %p2327, %s34, 1
          %s2329 = smul.addr %s2328, 4
          %s2330 = scalar_lea.vmem %s21, %s2329
        $region120: #{tpu_custom_call.1} parent=115 // pred_fallthru
          _
      $region116: #{tpu_custom_call.1} parent=5 // pred_fallthru
        _
    $region6: #{tpu_custom_call.1} parent=1 // loop_footer
      %s32 = sadd.s32 1, %s28
    $region7: #{tpu_custom_call.1} parent=1 // loop_footer_branch
      %27 = sbr.rel target = $region3
    $region8: #{tpu_custom_call.1} parent=1 // loop_exit
      _
    %2331 = vsyncpa [#allocation3], 1
    %s2332 = scalar_lea.sflag [#allocation3], 1
    %2333 = vsyncpa %s2332, 1

</llo_original>
